<compile_context>
chip_gen: v7x
topology: tpu7x:2x2x1
jax: 0.10.0
libtpu: 0.0.40
codegen_flags: <defaults>
</compile_context>

<pallas_src>
import math

import jax
import jax.numpy as jnp
from jax import lax
from jax.experimental import pallas as pl
from jax.experimental.pallas import tpu as pltpu

D_K = 64  # matches `d_k = d_v = 64` in the PyTorch module


def _sdpa_kernel(q_ref, k_ref, v_ref, mask_ref, ctx_ref, attn_ref):
    # Block shapes: q (1, TQ, D), k/v (1, S, D), mask (1, TQ, S),
    #               ctx (1, TQ, D), attn (1, TQ, S).
    q = q_ref[0]        # (TQ, D) bf16
    k = k_ref[0]        # (S,  D) bf16
    v = v_ref[0]        # (S,  D) bf16
    m = mask_ref[0]     # (TQ, S) int8; nonzero => masked

    scale = jnp.float32(1.0 / math.sqrt(D_K))

    # scores = Q @ K^T / sqrt(d_k).  Contraction over D is expressed directly
    # so the MXU consumes K without an explicit transpose.
    scores = lax.dot_general(
        q, k,
        dimension_numbers=(((1,), (1,)), ((), ())),
        preferred_element_type=jnp.float32,
    ) * scale

    # masked_fill_(attn_mask, -1e9)
    scores = jnp.where(m != 0, jnp.float32(-1.0e9), scores)

    # Numerically stable softmax along the key axis.
    s_max = jnp.max(scores, axis=-1, keepdims=True)
    p = jnp.exp(scores - s_max)
    denom = jnp.sum(p, axis=-1, keepdims=True)
    attn = p * pl.reciprocal(denom, approx=True)

    attn_ref[0] = attn.astype(attn_ref.dtype)

    # context = attn @ V  (bf16 operands, f32 accumulation on the MXU).
    context = jnp.dot(attn.astype(v.dtype), v, preferred_element_type=jnp.float32)
    ctx_ref[0] = context.astype(ctx_ref.dtype)


def _pick_tq(S: int) -> int:
    # Prefer a 128-row query tile (fits every gen's VMEM budget with room to
    # double-buffer); fall back to smaller divisors, else take the full axis.
    for cand in (128, 256, 64, 32, 16, 8):
        if S % cand == 0:
            return cand
    return S


def scaled_dot_product_attention(Q, K, V, attn_mask):
    """Q, K, V: [B, H, S, D]; attn_mask: [B, H, S, S] (True/nonzero = masked).

    Returns (context [B, H, S, D] f32, attn [B, H, S, S] f32), matching the
    PyTorch module's forward.
    """
    B, H, S, D = Q.shape
    assert D == D_K, f"head dim must be {D_K}"
    BH = B * H
    TQ = _pick_tq(S)
    n_q = S // TQ

    # bf16 Q/K/V halves HBM traffic and feeds the MXU natively; int8 mask
    # cuts the S^2 mask stream 4x vs int32.
    qf = Q.reshape(BH, S, D).astype(jnp.bfloat16)
    kf = K.reshape(BH, S, D).astype(jnp.bfloat16)
    vf = V.reshape(BH, S, D).astype(jnp.bfloat16)
    mf = attn_mask.reshape(BH, S, S).astype(jnp.int8)

    q_spec = pl.BlockSpec((1, TQ, D), lambda bh, qi: (bh, qi, 0))
    # K/V block index is constant along the qi axis -> stays resident per head.
    kv_spec = pl.BlockSpec((1, S, D), lambda bh, qi: (bh, 0, 0))
    mask_spec = pl.BlockSpec((1, TQ, S), lambda bh, qi: (bh, qi, 0))
    ctx_spec = pl.BlockSpec((1, TQ, D), lambda bh, qi: (bh, qi, 0))
    attn_spec = pl.BlockSpec((1, TQ, S), lambda bh, qi: (bh, qi, 0))

    ctx, attn = pl.pallas_call(
        _sdpa_kernel,
        out_shape=(
            jax.ShapeDtypeStruct((BH, S, D), jnp.float32),
            jax.ShapeDtypeStruct((BH, S, S), jnp.float32),
        ),
        grid_spec=pltpu.PrefetchScalarGridSpec(
            num_scalar_prefetch=0,
            grid=(BH, n_q),
            in_specs=[q_spec, kv_spec, kv_spec, mask_spec],
            out_specs=[ctx_spec, attn_spec],
        ),
        compiler_params=pltpu.CompilerParams(
            dimension_semantics=("parallel", "parallel"),
            vmem_limit_bytes=32 * 1024 * 1024,
        ),
    )(qf, kf, vf, mf)

    return ctx.reshape(B, H, S, D), attn.reshape(B, H, S, S)


def _reference(Q, K, V, attn_mask):
    scores = jnp.einsum("bhqd,bhkd->bhqk", Q, K) / math.sqrt(D_K)
    scores = jnp.where(attn_mask, -1.0e9, scores)
    attn = jax.nn.softmax(scores, axis=-1)
    context = jnp.einsum("bhqk,bhkd->bhqd", attn, V)
    return context, attn


if __name__ == "__main__":
    key = jax.random.PRNGKey(0)
    kq, kk, kv, km = jax.random.split(key, 4)

    # Small but representative shapes: S=256 with TQ=128 exercises the tiled
    # query grid; D must be 64 per the PyTorch module.
    B, H, S, D = 2, 2, 256, D_K
    Q = jax.random.normal(kq, (B, H, S, D), dtype=jnp.float32)
    K = jax.random.normal(kk, (B, H, S, D), dtype=jnp.float32)
    V = jax.random.normal(kv, (B, H, S, D), dtype=jnp.float32)
    # Random mask (True = masked), like the PyTorch attn_mask.
    attn_mask = jax.random.bernoulli(km, p=0.25, shape=(B, H, S, S))

    ctx, attn = scaled_dot_product_attention(Q, K, V, attn_mask)
    jax.block_until_ready((ctx, attn))

    ctx_ref, attn_ref = _reference(Q, K, V, attn_mask)
    # Tolerances loosened vs a pure-f32 path: matmul operands are bf16
    # (f32 accumulation) and the softmax denom uses the approx reciprocal.
    assert jnp.allclose(ctx, ctx_ref, atol=2e-2, rtol=2e-2)
    assert jnp.allclose(attn, attn_ref, atol=1e-2, rtol=1e-2)

    print("KERNEL_OK")
</pallas_src>

<mosaic_0001>
module attributes {stable_mosaic.version = 11 : i64} {
  func.func @_sdpa_kernel(%arg0: i32, %arg1: i32, %arg2: memref<1x128x64xbf16, #tpu.memory_space<vmem>>, %arg3: memref<1x256x64xbf16, #tpu.memory_space<vmem>>, %arg4: memref<1x256x64xbf16, #tpu.memory_space<vmem>>, %arg5: memref<1x128x256xi8, #tpu.memory_space<vmem>>, %arg6: memref<1x128x64xf32, #tpu.memory_space<vmem>>, %arg7: memref<1x128x256xf32, #tpu.memory_space<vmem>>) attributes {dimension_semantics = [#tpu.dimension_semantics<parallel>, #tpu.dimension_semantics<parallel>], iteration_bounds = array<i64: 4, 2>, scalar_prefetch = 0 : i64, scratch_operands = 0 : i64, tpu.core_type = #tpu.core_type<tc>, window_params = [{transform_indices = @transform_0, window_bounds = array<i64: 1, 128, 64>}, {transform_indices = @transform_1, window_bounds = array<i64: 1, 256, 64>}, {transform_indices = @transform_2, window_bounds = array<i64: 1, 256, 64>}, {transform_indices = @transform_3, window_bounds = array<i64: 1, 128, 256>}, {transform_indices = @transform_4, window_bounds = array<i64: 1, 128, 64>}, {transform_indices = @transform_5, window_bounds = array<i64: 1, 128, 256>}]} {
    %c0 = arith.constant 0 : index
    %c0_0 = arith.constant 0 : index
    %c0_1 = arith.constant 0 : index
    %0 = vector.load %arg2[%c0, %c0_0, %c0_1] : memref<1x128x64xbf16, #tpu.memory_space<vmem>>, vector<1x128x64xbf16>
    %1 = vector.shape_cast %0 : vector<1x128x64xbf16> to vector<128x64xbf16>
    %c0_2 = arith.constant 0 : index
    %c0_3 = arith.constant 0 : index
    %c0_4 = arith.constant 0 : index
    %2 = vector.load %arg3[%c0_2, %c0_3, %c0_4] : memref<1x256x64xbf16, #tpu.memory_space<vmem>>, vector<1x256x64xbf16>
    %3 = vector.shape_cast %2 : vector<1x256x64xbf16> to vector<256x64xbf16>
    %c0_5 = arith.constant 0 : index
    %c0_6 = arith.constant 0 : index
    %c0_7 = arith.constant 0 : index
    %4 = vector.load %arg4[%c0_5, %c0_6, %c0_7] : memref<1x256x64xbf16, #tpu.memory_space<vmem>>, vector<1x256x64xbf16>
    %5 = vector.shape_cast %4 : vector<1x256x64xbf16> to vector<256x64xbf16>
    %c0_8 = arith.constant 0 : index
    %c0_9 = arith.constant 0 : index
    %c0_10 = arith.constant 0 : index
    %6 = vector.load %arg5[%c0_8, %c0_9, %c0_10] : memref<1x128x256xi8, #tpu.memory_space<vmem>>, vector<1x128x256xi8>
    %7 = vector.shape_cast %6 : vector<1x128x256xi8> to vector<128x256xi8>
    %cst = arith.constant dense<0.000000e+00> : vector<128x256xf32>
    %8 = tpu.matmul %1, %3, %cst {dimension_numbers = #tpu.dot_dimension_numbers<[1], [1], [0], [0], [0, 0, 1, 0], [], []>} : vector<128x64xbf16>, vector<256x64xbf16>, vector<128x256xf32> -> vector<128x256xf32>
    %cst_11 = arith.constant 1.250000e-01 : f32
    %9 = vector.broadcast %cst_11 : f32 to vector<128x256xf32>
    %10 = arith.mulf %8, %9 : vector<128x256xf32>
    %c0_i8 = arith.constant 0 : i8
    %11 = vector.broadcast %c0_i8 : i8 to vector<128x256xi8>
    %12 = arith.cmpi ne, %7, %11 : vector<128x256xi8>
    %cst_12 = arith.constant -1.000000e+09 : f32
    %13 = vector.broadcast %cst_12 : f32 to vector<128x256xf32>
    %14 = arith.select %12, %13, %10 : vector<128x256xi1>, vector<128x256xf32>
    %cst_13 = arith.constant dense<0xFF800000> : vector<128xf32>
    %15 = vector.multi_reduction <maximumf>, %14, %cst_13 [1] : vector<128x256xf32> to vector<128xf32>
    %16 = vector.shape_cast %15 : vector<128xf32> to vector<128x1xf32>
    %17 = vector.broadcast %16 : vector<128x1xf32> to vector<128x256xf32>
    %18 = arith.subf %14, %17 : vector<128x256xf32>
    %19 = math.exp %18 : vector<128x256xf32>
    %cst_14 = arith.constant dense<0.000000e+00> : vector<128xf32>
    %20 = vector.multi_reduction <add>, %19, %cst_14 [1] : vector<128x256xf32> to vector<128xf32>
    %21 = vector.shape_cast %20 : vector<128xf32> to vector<128x1xf32>
    %22 = tpu.reciprocal %21 {approx = true} : vector<128x1xf32> -> vector<128x1xf32>
    %23 = vector.broadcast %22 : vector<128x1xf32> to vector<128x256xf32>
    %24 = arith.mulf %19, %23 : vector<128x256xf32>
    %c0_15 = arith.constant 0 : index
    %c0_16 = arith.constant 0 : index
    %c0_17 = arith.constant 0 : index
    %25 = vector.load %arg7[%c0_15, %c0_16, %c0_17] : memref<1x128x256xf32, #tpu.memory_space<vmem>>, vector<1x128x256xf32>
    %26 = vector.shape_cast %25 : vector<1x128x256xf32> to vector<128x256xf32>
    %27 = vector.shape_cast %24 : vector<128x256xf32> to vector<1x128x256xf32>
    tpu.vector_store %arg7[%c0_15, %c0_16, %c0_17], %27 {strides = array<i32>} : memref<1x128x256xf32, #tpu.memory_space<vmem>>, vector<1x128x256xf32>,
    %28 = arith.truncf %24 : vector<128x256xf32> to vector<128x256xbf16>
    %cst_18 = arith.constant dense<0.000000e+00> : vector<128x64xf32>
    %29 = tpu.matmul %28, %5, %cst_18 {dimension_numbers = #tpu.dot_dimension_numbers<[1], [0], [0], [1], [0, 0, 1, 1], [], []>} : vector<128x256xbf16>, vector<256x64xbf16>, vector<128x64xf32> -> vector<128x64xf32>
    %c0_19 = arith.constant 0 : index
    %c0_20 = arith.constant 0 : index
    %c0_21 = arith.constant 0 : index
    %30 = vector.load %arg6[%c0_19, %c0_20, %c0_21] : memref<1x128x64xf32, #tpu.memory_space<vmem>>, vector<1x128x64xf32>
    %31 = vector.shape_cast %30 : vector<1x128x64xf32> to vector<128x64xf32>
    %32 = vector.shape_cast %29 : vector<128x64xf32> to vector<1x128x64xf32>
    tpu.vector_store %arg6[%c0_19, %c0_20, %c0_21], %32 {strides = array<i32>} : memref<1x128x64xf32, #tpu.memory_space<vmem>>, vector<1x128x64xf32>,
    return
  }
  func.func @transform_0(%arg0: i32, %arg1: i32) -> (i32, i32, i32) {
    %c0_i32 = arith.constant 0 : i32
    %c0_i32_0 = arith.constant 0 : i32
    return %arg0, %arg1, %c0_i32 : i32, i32, i32
  }
  func.func @transform_1(%arg0: i32, %arg1: i32) -> (i32, i32, i32) {
    %c0_i32 = arith.constant 0 : i32
    %c0_i32_0 = arith.constant 0 : i32
    %c0_i32_1 = arith.constant 0 : i32
    return %arg0, %c0_i32, %c0_i32_0 : i32, i32, i32
  }
  func.func @transform_2(%arg0: i32, %arg1: i32) -> (i32, i32, i32) {
    %c0_i32 = arith.constant 0 : i32
    %c0_i32_0 = arith.constant 0 : i32
    %c0_i32_1 = arith.constant 0 : i32
    return %arg0, %c0_i32, %c0_i32_0 : i32, i32, i32
  }
  func.func @transform_3(%arg0: i32, %arg1: i32) -> (i32, i32, i32) {
    %c0_i32 = arith.constant 0 : i32
    %c0_i32_0 = arith.constant 0 : i32
    return %arg0, %arg1, %c0_i32 : i32, i32, i32
  }
  func.func @transform_4(%arg0: i32, %arg1: i32) -> (i32, i32, i32) {
    %c0_i32 = arith.constant 0 : i32
    %c0_i32_0 = arith.constant 0 : i32
    return %arg0, %arg1, %c0_i32 : i32, i32, i32
  }
  func.func @transform_5(%arg0: i32, %arg1: i32) -> (i32, i32, i32) {
    %c0_i32 = arith.constant 0 : i32
    %c0_i32_0 = arith.constant 0 : i32
    return %arg0, %arg1, %c0_i32 : i32, i32, i32
  }
}

</mosaic_0001>

<llo_original>
// kernel: tpu_custom_call.1
$region0: #{tpu_custom_call.1}
  #allocation0 [shape = 'u32[]', space=smem, size = 0x4, offset = 0x4, fixed_abs, tag = 'smem constant byte address 0x4 - core index']
  #allocation1 [shape = 'u32[144,128]{1,0:T(1,128)}', space=vmem, size = 0x12000, scoped, tag = 'internal scratch']
  %s0 = inlined_call_operand.vmem [shape: bf16[4,256,64], index: 0, kind: input, shape index: {}]
  %s1 = inlined_call_operand.vmem [shape: bf16[4,256,64], index: 1, kind: input, shape index: {}]
  %s2 = inlined_call_operand.vmem [shape: bf16[4,256,64], index: 2, kind: input, shape index: {}]
  %s3 = inlined_call_operand.vmem [shape: s8[4,256,256], index: 3, kind: input, shape index: {}]
  %s4 = inlined_call_operand.vmem [shape: f32[4,256,64], index: 4, kind: output, shape index: {0}]
  %s5 = inlined_call_operand.hbm [shape: f32[4,256,256], index: 5, kind: output, shape index: {1}]
  %6 = xla_tuple %s4, %s5
  %s7 = sld [smem:[#allocation0]]
  $region57: #{tpu_custom_call.1} parent=0
    _
  %s9 = ssub.s32 1, %s7
  %s10 = scalar_select 0, %s9, %s7
  $region1: #{tpu_custom_call.1} parent=0
    #allocation2 [shape = 'u8[262144]{0}', space=vmem, size = 0x40000, scoped, tag = 'output window, operand 1']
    #allocation3 [shape = 's32[2]{0}', space=sflag, size = 0x8, scoped, tag = 'scoped memory for tpu_custom_call.1']
    %11 = vsyncpa [#allocation3], 0
    %s12 = scalar_lea.sflag [#allocation3], 1
    %13 = vsyncpa %s12, 0
    loop: start=0, step=1, limit=10
    $region2: #{tpu_custom_call.1} parent=1 // loop_pre_header
      _
    $region3: #{tpu_custom_call.1} parent=1 // loop_header
      %s15 = sphi 0, %s19
      %p16 = scmp.ge.s32.totalorder %s15, 10
      %s22 = sphi 0, %s34
      %s23 = sphi 0, %s30
      %s24 = sphi 0, %s22
      %s25 = sphi 0, %s23
      %s26 = sphi 0, %s24
      %s27 = sphi 0, %s25
      %s39 = sphi 0, %s41
      %s42 = sphi 0, %s39
      %s43 = sphi 0, %s42
      %s59 = sphi 0, %s43
      %s65 = sphi 0, %s67
      %s68 = sphi 0, %s65
      %s69 = sphi 0, %s68
      %s85 = sphi 0, %s69
      %s91 = sphi 0, %s93
      %s94 = sphi 0, %s91
      %s95 = sphi 0, %s94
      %s111 = sphi 0, %s95
      %s119 = sphi 0, %s121
      %s122 = sphi 0, %s119
      %s123 = sphi 0, %s122
      %s139 = sphi 0, %s123
      %s147 = sphi 0, %s149
      %s150 = sphi 0, %s147
      %s151 = sphi 0, %s150
      %s167 = sphi 0, %s151
      %s175 = sphi 0, %s177
      %s178 = sphi 0, %s175
      %s179 = sphi 0, %s178
      %s195 = sphi 0, %s179
    $region4: #{tpu_custom_call.1} parent=1 // loop_header_branch
      %18 = sbr.rel (%p16) target = $region8
    $region5: #{tpu_custom_call.1} parent=1 // loop_body
      %s20 = ssub.s32 %s15, 1
      %s21 = ssub.s32 %s15, 2
      %s28 = sadd.s32 1, %s23
      %p29 = scmp.ge.s32.totalorder %s28, 2
      %s30 = scalar_select %p29, 0, %s28
      %s31 = sadd.s32 1, %s22
      %s32 = scalar_select %p29, %s31, %s22
      %p33 = scmp.ge.s32.totalorder %s32, 4
      %s34 = scalar_select %p33, 0, %s32
      %s35 = ssub.s32 %s22, %s34
      %s36 = ssub.s32 %s23, %s30
      %s37 = sor.u32 %s35, %s36
      %p38 = scmp.eq.s32.totalorder %s37, 0
      %s40 = sadd.s32 %s39, 1
      %s41 = scalar_select %p38, %s39, %s40
      %p44 = pneg %p38
      %p45 = scmp.eq.s32.totalorder %s15, 7
      %p46 = por %p44, %p45
      %p47 = scmp.ne.s32.totalorder %s39, %s42
      %p48 = scmp.eq.s32.totalorder %s15, 0
      %p49 = por %p47, %p48
      %p50 = scmp.ne.s32.totalorder %s39, %s42
      %p51 = scmp.eq.s32.totalorder %s20, 7
      %p52 = por %p50, %p51
      %p53 = scmp.ne.s32.totalorder %s42, %s43
      %p54 = scmp.eq.s32.totalorder %s20, 0
      %p55 = por %p53, %p54
      %p56 = scmp.ne.s32.totalorder %s42, %s43
      %p57 = scmp.eq.s32.totalorder %s21, 7
      %p58 = por %p56, %p57
      %p60 = scmp.ne.s32.totalorder %s43, %s59
      %p61 = scmp.eq.s32.totalorder %s21, 0
      %p62 = por %p60, %p61
      %s63 = ssub.s32 %s22, %s34
      %p64 = scmp.eq.s32.totalorder %s63, 0
      %s66 = sadd.s32 %s65, 1
      %s67 = scalar_select %p64, %s65, %s66
      %p70 = pneg %p64
      %p71 = scmp.eq.s32.totalorder %s15, 7
      %p72 = por %p70, %p71
      %p73 = scmp.ne.s32.totalorder %s65, %s68
      %p74 = scmp.eq.s32.totalorder %s15, 0
      %p75 = por %p73, %p74
      %p76 = scmp.ne.s32.totalorder %s65, %s68
      %p77 = scmp.eq.s32.totalorder %s20, 7
      %p78 = por %p76, %p77
      %p79 = scmp.ne.s32.totalorder %s68, %s69
      %p80 = scmp.eq.s32.totalorder %s20, 0
      %p81 = por %p79, %p80
      %p82 = scmp.ne.s32.totalorder %s68, %s69
      %p83 = scmp.eq.s32.totalorder %s21, 7
      %p84 = por %p82, %p83
      %p86 = scmp.ne.s32.totalorder %s69, %s85
      %p87 = scmp.eq.s32.totalorder %s21, 0
      %p88 = por %p86, %p87
      %s89 = ssub.s32 %s22, %s34
      %p90 = scmp.eq.s32.totalorder %s89, 0
      %s92 = sadd.s32 %s91, 1
      %s93 = scalar_select %p90, %s91, %s92
      %p96 = pneg %p90
      %p97 = scmp.eq.s32.totalorder %s15, 7
      %p98 = por %p96, %p97
      %p99 = scmp.ne.s32.totalorder %s91, %s94
      %p100 = scmp.eq.s32.totalorder %s15, 0
      %p101 = por %p99, %p100
      %p102 = scmp.ne.s32.totalorder %s91, %s94
      %p103 = scmp.eq.s32.totalorder %s20, 7
      %p104 = por %p102, %p103
      %p105 = scmp.ne.s32.totalorder %s94, %s95
      %p106 = scmp.eq.s32.totalorder %s20, 0
      %p107 = por %p105, %p106
      %p108 = scmp.ne.s32.totalorder %s94, %s95
      %p109 = scmp.eq.s32.totalorder %s21, 7
      %p110 = por %p108, %p109
      %p112 = scmp.ne.s32.totalorder %s95, %s111
      %p113 = scmp.eq.s32.totalorder %s21, 0
      %p114 = por %p112, %p113
      %s115 = ssub.s32 %s22, %s34
      %s116 = ssub.s32 %s23, %s30
      %s117 = sor.u32 %s115, %s116
      %p118 = scmp.eq.s32.totalorder %s117, 0
      %s120 = sadd.s32 %s119, 1
      %s121 = scalar_select %p118, %s119, %s120
      %p124 = pneg %p118
      %p125 = scmp.eq.s32.totalorder %s15, 7
      %p126 = por %p124, %p125
      %p127 = scmp.ne.s32.totalorder %s119, %s122
      %p128 = scmp.eq.s32.totalorder %s15, 0
      %p129 = por %p127, %p128
      %p130 = scmp.ne.s32.totalorder %s119, %s122
      %p131 = scmp.eq.s32.totalorder %s20, 7
      %p132 = por %p130, %p131
      %p133 = scmp.ne.s32.totalorder %s122, %s123
      %p134 = scmp.eq.s32.totalorder %s20, 0
      %p135 = por %p133, %p134
      %p136 = scmp.ne.s32.totalorder %s122, %s123
      %p137 = scmp.eq.s32.totalorder %s21, 7
      %p138 = por %p136, %p137
      %p140 = scmp.ne.s32.totalorder %s123, %s139
      %p141 = scmp.eq.s32.totalorder %s21, 0
      %p142 = por %p140, %p141
      %s143 = ssub.s32 %s22, %s34
      %s144 = ssub.s32 %s23, %s30
      %s145 = sor.u32 %s143, %s144
      %p146 = scmp.eq.s32.totalorder %s145, 0
      %s148 = sadd.s32 %s147, 1
      %s149 = scalar_select %p146, %s147, %s148
      %p152 = pneg %p146
      %p153 = scmp.eq.s32.totalorder %s15, 7
      %p154 = por %p152, %p153
      %p155 = scmp.ne.s32.totalorder %s147, %s150
      %p156 = scmp.eq.s32.totalorder %s15, 0
      %p157 = por %p155, %p156
      %p158 = scmp.ne.s32.totalorder %s147, %s150
      %p159 = scmp.eq.s32.totalorder %s20, 7
      %p160 = por %p158, %p159
      %p161 = scmp.ne.s32.totalorder %s150, %s151
      %p162 = scmp.eq.s32.totalorder %s20, 0
      %p163 = por %p161, %p162
      %p164 = scmp.ne.s32.totalorder %s150, %s151
      %p165 = scmp.eq.s32.totalorder %s21, 7
      %p166 = por %p164, %p165
      %p168 = scmp.ne.s32.totalorder %s151, %s167
      %p169 = scmp.eq.s32.totalorder %s21, 0
      %p170 = por %p168, %p169
      %s171 = ssub.s32 %s22, %s34
      %s172 = ssub.s32 %s23, %s30
      %s173 = sor.u32 %s171, %s172
      %p174 = scmp.eq.s32.totalorder %s173, 0
      %s176 = sadd.s32 %s175, 1
      %s177 = scalar_select %p174, %s175, %s176
      %p180 = pneg %p174
      %p181 = scmp.eq.s32.totalorder %s15, 7
      %p182 = por %p180, %p181
      %p183 = scmp.ne.s32.totalorder %s175, %s178
      %p184 = scmp.eq.s32.totalorder %s15, 0
      %p185 = por %p183, %p184
      %p186 = scmp.ne.s32.totalorder %s175, %s178
      %p187 = scmp.eq.s32.totalorder %s20, 7
      %p188 = por %p186, %p187
      %p189 = scmp.ne.s32.totalorder %s178, %s179
      %p190 = scmp.eq.s32.totalorder %s20, 0
      %p191 = por %p189, %p190
      %p192 = scmp.ne.s32.totalorder %s178, %s179
      %p193 = scmp.eq.s32.totalorder %s21, 7
      %p194 = por %p192, %p193
      %p196 = scmp.ne.s32.totalorder %s179, %s195
      %p197 = scmp.eq.s32.totalorder %s21, 0
      %p198 = por %p196, %p197
      %p199 = scmp.le.s32.totalorder 1, %s15
      %p200 = scmp.lt.s32.totalorder %s15, 9
      %p201 = pnand %p199, %p200
      %p202 = pneg %p201
      // Predicated region
      $region9: #{tpu_custom_call.1} parent=5 // pred_check
        _
      $region10: #{tpu_custom_call.1} parent=5 // pred_check_branch
        %204 = sbr.rel (%p201) target = $region12
      $region11: #{tpu_custom_call.1} parent=5 // pred_region
        %s205 = ssub.s32 %s15, 1
      $region12: #{tpu_custom_call.1} parent=5 // pred_fallthru
        _
      %p206 = scmp.lt.s32.totalorder %s15, 8
      // Predicated region
      $region13: #{tpu_custom_call.1} parent=5 // pred_check
        %p207 = pneg %p206
      $region14: #{tpu_custom_call.1} parent=5 // pred_check_branch
        %209 = sbr.rel (%p207) target = $region16
      $region15: #{tpu_custom_call.1} parent=5 // pred_region
        // Predicated region
        $region17: #{tpu_custom_call.1} parent=15 // pred_check
          %p210 = pneg %p49
        $region18: #{tpu_custom_call.1} parent=15 // pred_check_branch
          %212 = sbr.rel (%p210) target = $region20
        $region19: #{tpu_custom_call.1} parent=15 // pred_region
          %s213 = smul.u32 16, %s23
          %p214 = scmp.lt.s32.totalorder %s22, 3
          %s215 = scalar_select %p214, %s22, 3
          %p216 = scmp.lt.s32.totalorder %s213, 31
          %s217 = scalar_select %p216, %s213, 31
          %s218 = smul.addr %s215, 32
          %s219 = sadd.s32 %s217, %s218
          %s220 = smul.addr %s219, 4
          %s221 = scalar_lea.vmem %s0, %s220
          %s222 = smul.u32 16, %s23
        $region20: #{tpu_custom_call.1} parent=15 // pred_fallthru
          _
        // Predicated region
        $region21: #{tpu_custom_call.1} parent=15 // pred_check
          %p223 = pneg %p75
        $region22: #{tpu_custom_call.1} parent=15 // pred_check_branch
          %225 = sbr.rel (%p223) target = $region24
        $region23: #{tpu_custom_call.1} parent=15 // pred_region
          %p226 = scmp.lt.s32.totalorder %s22, 3
          %s227 = scalar_select %p226, %s22, 3
          %s228 = smul.addr %s227, 32
          %s229 = smul.addr %s228, 4
          %s230 = scalar_lea.vmem %s1, %s229
        $region24: #{tpu_custom_call.1} parent=15 // pred_fallthru
          _
        // Predicated region
        $region25: #{tpu_custom_call.1} parent=15 // pred_check
          %p231 = pneg %p101
        $region26: #{tpu_custom_call.1} parent=15 // pred_check_branch
          %233 = sbr.rel (%p231) target = $region28
        $region27: #{tpu_custom_call.1} parent=15 // pred_region
          %p234 = scmp.lt.s32.totalorder %s22, 3
          %s235 = scalar_select %p234, %s22, 3
          %s236 = smul.addr %s235, 32
          %s237 = smul.addr %s236, 4
          %s238 = scalar_lea.vmem %s2, %s237
        $region28: #{tpu_custom_call.1} parent=15 // pred_fallthru
          _
        // Predicated region
        $region29: #{tpu_custom_call.1} parent=15 // pred_check
          %p239 = pneg %p129
        $region30: #{tpu_custom_call.1} parent=15 // pred_check_branch
          %241 = sbr.rel (%p239) target = $region32
        $region31: #{tpu_custom_call.1} parent=15 // pred_region
          %s242 = smul.u32 4, %s23
          %p243 = scmp.lt.s32.totalorder %s22, 3
          %s244 = scalar_select %p243, %s22, 3
          %p245 = scmp.lt.s32.totalorder %s242, 7
          %s246 = scalar_select %p245, %s242, 7
          %s247 = smul.addr %s246, 2
          %s248 = smul.addr %s244, 16
          %s249 = sadd.s32 %s247, %s248
          %s250 = smul.addr %s249, 8
          %s251 = scalar_lea.vmem %s3, %s250
          %s252 = smul.u32 4, %s23
        $region32: #{tpu_custom_call.1} parent=15 // pred_fallthru
          _
      $region16: #{tpu_custom_call.1} parent=5 // pred_fallthru
        _
      %p253 = scmp.le.s32.totalorder 1, %s15
      %p254 = scmp.lt.s32.totalorder %s15, 9
      %p255 = pnand %p253, %p254
      %p256 = pneg %p255
      // Predicated region
      $region33: #{tpu_custom_call.1} parent=5 // pred_check
        _
      $region34: #{tpu_custom_call.1} parent=5 // pred_check_branch
        %258 = sbr.rel (%p255) target = $region36
      $region35: #{tpu_custom_call.1} parent=5 // pred_region
        %s259 = ssub.s32 %s15, 1
        %s260 = smul.u32 16, %s25
        %p261 = scmp.lt.s32.totalorder %s24, 3
        %s262 = scalar_select %p261, %s24, 3
        %p263 = scmp.lt.s32.totalorder %s260, 31
        %s264 = scalar_select %p263, %s260, 31
        %s265 = smul.addr %s262, 32
        %s266 = sadd.s32 %s264, %s265
        %s267 = smul.addr %s266, 4
        %s268 = scalar_lea.vmem %s0, %s267
        %p269 = pneg %p55
        %p270 = pneg %p52
        %p271 = scmp.lt.s32.totalorder %s24, 3
        %s272 = scalar_select %p271, %s24, 3
        %s273 = smul.addr %s272, 32
        %s274 = smul.addr %s273, 4
        %s275 = scalar_lea.vmem %s1, %s274
        %p276 = pneg %p81
        %p277 = pneg %p78
        %p278 = scmp.lt.s32.totalorder %s24, 3
        %s279 = scalar_select %p278, %s24, 3
        %s280 = smul.addr %s279, 32
        %s281 = smul.addr %s280, 4
        %s282 = scalar_lea.vmem %s2, %s281
        %p283 = pneg %p107
        %p284 = pneg %p104
        %s285 = smul.u32 4, %s25
        %p286 = scmp.lt.s32.totalorder %s24, 3
        %s287 = scalar_select %p286, %s24, 3
        %p288 = scmp.lt.s32.totalorder %s285, 7
        %s289 = scalar_select %p288, %s285, 7
        %s290 = smul.addr %s289, 2
        %s291 = smul.addr %s287, 16
        %s292 = sadd.s32 %s290, %s291
        %s293 = smul.addr %s292, 8
        %s294 = scalar_lea.vmem %s3, %s293
        %p295 = pneg %p135
        %p296 = pneg %p132
        %p297 = pneg %p163
        %p298 = pneg %p160
        %s299 = smul.u32 16, %s25
        %p300 = scmp.lt.s32.totalorder %s24, 3
        %s301 = scalar_select %p300, %s24, 3
        %p302 = scmp.lt.s32.totalorder %s299, 31
        %s303 = scalar_select %p302, %s299, 31
        %s304 = smul.addr %s301, 32
        %s305 = sadd.s32 %s303, %s304
        %s306 = smul.addr %s305, 8
        %s307 = scalar_lea.vmem %s4, %s306
        %p308 = pneg %p191
        %p309 = pneg %p188
        %s310 = sand.u32 %s178, 1
        %s311 = scalar_lea.sflag [#allocation3], %s310
        %s312 = sand.u32 %s178, 1
        %s313 = smul.addr %s312, 256
        %s314 = scalar_lea.vmem [#allocation2], %s313
        %s315 = smul.u32 16, %s25
        %p316 = scmp.lt.s32.totalorder %s24, 3
        %s317 = scalar_select %p316, %s24, 3
        %p318 = scmp.lt.s32.totalorder %s315, 31
        %s319 = scalar_select %p318, %s315, 31
        %s320 = smul.addr %s317, 32
        %s321 = sadd.s32 %s319, %s320
        %s322 = smul.addr %s321, 4
        %s323 = scalar_lea.vmem %s0, %s322
        %s324 = smul.u32 16, %s25
        %p325 = scmp.lt.s32.totalorder %s24, 3
        %s326 = scalar_select %p325, %s24, 3
        %s327 = smul.addr %s326, 32
        %s328 = smul.addr %s327, 4
        %s329 = scalar_lea.vmem %s1, %s328
        %p330 = scmp.lt.s32.totalorder %s24, 3
        %s331 = scalar_select %p330, %s24, 3
        %s332 = smul.addr %s331, 32
        %s333 = smul.addr %s332, 4
        %s334 = scalar_lea.vmem %s2, %s333
        %s335 = smul.u32 4, %s25
        %p336 = scmp.lt.s32.totalorder %s24, 3
        %s337 = scalar_select %p336, %s24, 3
        %p338 = scmp.lt.s32.totalorder %s335, 7
        %s339 = scalar_select %p338, %s335, 7
        %s340 = smul.addr %s339, 2
        %s341 = smul.addr %s337, 16
        %s342 = sadd.s32 %s340, %s341
        %s343 = smul.addr %s342, 8
        %s344 = scalar_lea.vmem %s3, %s343
        %s345 = smul.u32 4, %s25
        %s346 = smul.u32 16, %s25
        %p347 = scmp.lt.s32.totalorder %s24, 3
        %s348 = scalar_select %p347, %s24, 3
        %p349 = scmp.lt.s32.totalorder %s346, 31
        %s350 = scalar_select %p349, %s346, 31
        %s351 = smul.addr %s348, 32
        %s352 = sadd.s32 %s350, %s351
        %s353 = smul.addr %s352, 8
        %s354 = scalar_lea.vmem %s4, %s353
        %s355 = smul.u32 16, %s25
        %s356 = smul.u32 16, %s25
        %v360 = vld [vmem:[%s323] sm:$0xf]
        %v361 = vld [vmem:[%s323 + $0x4] sm:$0xf]
        %v362 = vld [vmem:[%s323 + $0x8] sm:$0xf]
        %v363 = vld [vmem:[%s323 + $0xc] sm:$0xf]
        %v364 = vld [vmem:[%s323 + $0x10] sm:$0xf]
        %v365 = vld [vmem:[%s323 + $0x14] sm:$0xf]
        %v366 = vld [vmem:[%s323 + $0x18] sm:$0xf]
        %v367 = vld [vmem:[%s323 + $0x1c] sm:$0xf]
        %v368 = vld [vmem:[%s323 + $0x20] sm:$0xf]
        %v369 = vld [vmem:[%s323 + $0x24] sm:$0xf]
        %v370 = vld [vmem:[%s323 + $0x28] sm:$0xf]
        %v371 = vld [vmem:[%s323 + $0x2c] sm:$0xf]
        %v372 = vld [vmem:[%s323 + $0x30] sm:$0xf]
        %v373 = vld [vmem:[%s323 + $0x34] sm:$0xf]
        %v374 = vld [vmem:[%s323 + $0x38] sm:$0xf]
        %v375 = vld [vmem:[%s323 + $0x3c] sm:$0xf]
        %v376 = vld [vmem:[%s329] sm:$0xf]
        %v377 = vld [vmem:[%s329 + $0x4] sm:$0xf]
        %v378 = vld [vmem:[%s329 + $0x8] sm:$0xf]
        %v379 = vld [vmem:[%s329 + $0xc] sm:$0xf]
        %v380 = vld [vmem:[%s329 + $0x10] sm:$0xf]
        %v381 = vld [vmem:[%s329 + $0x14] sm:$0xf]
        %v382 = vld [vmem:[%s329 + $0x18] sm:$0xf]
        %v383 = vld [vmem:[%s329 + $0x1c] sm:$0xf]
        %v384 = vld [vmem:[%s329 + $0x20] sm:$0xf]
        %v385 = vld [vmem:[%s329 + $0x24] sm:$0xf]
        %v386 = vld [vmem:[%s329 + $0x28] sm:$0xf]
        %v387 = vld [vmem:[%s329 + $0x2c] sm:$0xf]
        %v388 = vld [vmem:[%s329 + $0x30] sm:$0xf]
        %v389 = vld [vmem:[%s329 + $0x34] sm:$0xf]
        %v390 = vld [vmem:[%s329 + $0x38] sm:$0xf]
        %v391 = vld [vmem:[%s329 + $0x3c] sm:$0xf]
        %v392 = vld [vmem:[%s329 + $0x40] sm:$0xf]
        %v393 = vld [vmem:[%s329 + $0x44] sm:$0xf]
        %v394 = vld [vmem:[%s329 + $0x48] sm:$0xf]
        %v395 = vld [vmem:[%s329 + $0x4c] sm:$0xf]
        %v396 = vld [vmem:[%s329 + $0x50] sm:$0xf]
        %v397 = vld [vmem:[%s329 + $0x54] sm:$0xf]
        %v398 = vld [vmem:[%s329 + $0x58] sm:$0xf]
        %v399 = vld [vmem:[%s329 + $0x5c] sm:$0xf]
        %v400 = vld [vmem:[%s329 + $0x60] sm:$0xf]
        %v401 = vld [vmem:[%s329 + $0x64] sm:$0xf]
        %v402 = vld [vmem:[%s329 + $0x68] sm:$0xf]
        %v403 = vld [vmem:[%s329 + $0x6c] sm:$0xf]
        %v404 = vld [vmem:[%s329 + $0x70] sm:$0xf]
        %v405 = vld [vmem:[%s329 + $0x74] sm:$0xf]
        %v406 = vld [vmem:[%s329 + $0x78] sm:$0xf]
        %v407 = vld [vmem:[%s329 + $0x7c] sm:$0xf]
        %v408 = vld [vmem:[%s334] sm:$0xf]
        %v409 = vld [vmem:[%s334 + $0x4] sm:$0xf]
        %v410 = vld [vmem:[%s334 + $0x8] sm:$0xf]
        %v411 = vld [vmem:[%s334 + $0xc] sm:$0xf]
        %v412 = vld [vmem:[%s334 + $0x10] sm:$0xf]
        %v413 = vld [vmem:[%s334 + $0x14] sm:$0xf]
        %v414 = vld [vmem:[%s334 + $0x18] sm:$0xf]
        %v415 = vld [vmem:[%s334 + $0x1c] sm:$0xf]
        %v416 = vld [vmem:[%s334 + $0x20] sm:$0xf]
        %v417 = vld [vmem:[%s334 + $0x24] sm:$0xf]
        %v418 = vld [vmem:[%s334 + $0x28] sm:$0xf]
        %v419 = vld [vmem:[%s334 + $0x2c] sm:$0xf]
        %v420 = vld [vmem:[%s334 + $0x30] sm:$0xf]
        %v421 = vld [vmem:[%s334 + $0x34] sm:$0xf]
        %v422 = vld [vmem:[%s334 + $0x38] sm:$0xf]
        %v423 = vld [vmem:[%s334 + $0x3c] sm:$0xf]
        %v424 = vld [vmem:[%s334 + $0x40] sm:$0xf]
        %v425 = vld [vmem:[%s334 + $0x44] sm:$0xf]
        %v426 = vld [vmem:[%s334 + $0x48] sm:$0xf]
        %v427 = vld [vmem:[%s334 + $0x4c] sm:$0xf]
        %v428 = vld [vmem:[%s334 + $0x50] sm:$0xf]
        %v429 = vld [vmem:[%s334 + $0x54] sm:$0xf]
        %v430 = vld [vmem:[%s334 + $0x58] sm:$0xf]
        %v431 = vld [vmem:[%s334 + $0x5c] sm:$0xf]
        %v432 = vld [vmem:[%s334 + $0x60] sm:$0xf]
        %v433 = vld [vmem:[%s334 + $0x64] sm:$0xf]
        %v434 = vld [vmem:[%s334 + $0x68] sm:$0xf]
        %v435 = vld [vmem:[%s334 + $0x6c] sm:$0xf]
        %v436 = vld [vmem:[%s334 + $0x70] sm:$0xf]
        %v437 = vld [vmem:[%s334 + $0x74] sm:$0xf]
        %v438 = vld [vmem:[%s334 + $0x78] sm:$0xf]
        %v439 = vld [vmem:[%s334 + $0x7c] sm:$0xf]
        %v440 = vld [vmem:[%s344] sm:$0xff]
        %v441 = vld [vmem:[%s344 + $0x8] sm:$0xff]
        %v442 = vld [vmem:[%s344 + $0x10] sm:$0xff]
        %v443 = vld [vmem:[%s344 + $0x18] sm:$0xff]
        %v444 = vld [vmem:[%s344 + $0x20] sm:$0xff]
        %v445 = vld [vmem:[%s344 + $0x28] sm:$0xff]
        %v446 = vld [vmem:[%s344 + $0x30] sm:$0xff]
        %v447 = vld [vmem:[%s344 + $0x38] sm:$0xff]
        %v464 = vunpack.c.l.b16 %v360
        %v465 = vunpack.c.l.b16 %v361
        %v466 = vunpack.c.l.b16 %v362
        %v467 = vunpack.c.l.b16 %v363
        %v468 = vunpack.c.l.b16 %v364
        %v469 = vunpack.c.l.b16 %v365
        %v470 = vunpack.c.l.b16 %v366
        %v471 = vunpack.c.l.b16 %v367
        %v472 = vunpack.c.l.b16 %v368
        %v473 = vunpack.c.l.b16 %v369
        %v474 = vunpack.c.l.b16 %v370
        %v475 = vunpack.c.l.b16 %v371
        %v476 = vunpack.c.l.b16 %v372
        %v477 = vunpack.c.l.b16 %v373
        %v478 = vunpack.c.l.b16 %v374
        %v479 = vunpack.c.l.b16 %v375
        %v480 = vpack.c.b16 %v465, %v464
        %v481 = vpack.c.b16 %v467, %v466
        %v482 = vpack.c.b16 %v469, %v468
        %v483 = vpack.c.b16 %v471, %v470
        %v484 = vpack.c.b16 %v473, %v472
        %v485 = vpack.c.b16 %v475, %v474
        %v486 = vpack.c.b16 %v477, %v476
        %v487 = vpack.c.b16 %v479, %v478
        %v520 = vunpack.c.l.b16 %v376
        %v521 = vunpack.c.l.b16 %v377
        %v522 = vunpack.c.l.b16 %v378
        %v523 = vunpack.c.l.b16 %v379
        %v524 = vunpack.c.l.b16 %v380
        %v525 = vunpack.c.l.b16 %v381
        %v526 = vunpack.c.l.b16 %v382
        %v527 = vunpack.c.l.b16 %v383
        %v528 = vunpack.c.l.b16 %v384
        %v529 = vunpack.c.l.b16 %v385
        %v530 = vunpack.c.l.b16 %v386
        %v531 = vunpack.c.l.b16 %v387
        %v532 = vunpack.c.l.b16 %v388
        %v533 = vunpack.c.l.b16 %v389
        %v534 = vunpack.c.l.b16 %v390
        %v535 = vunpack.c.l.b16 %v391
        %v536 = vunpack.c.l.b16 %v392
        %v537 = vunpack.c.l.b16 %v393
        %v538 = vunpack.c.l.b16 %v394
        %v539 = vunpack.c.l.b16 %v395
        %v540 = vunpack.c.l.b16 %v396
        %v541 = vunpack.c.l.b16 %v397
        %v542 = vunpack.c.l.b16 %v398
        %v543 = vunpack.c.l.b16 %v399
        %v544 = vunpack.c.l.b16 %v400
        %v545 = vunpack.c.l.b16 %v401
        %v546 = vunpack.c.l.b16 %v402
        %v547 = vunpack.c.l.b16 %v403
        %v548 = vunpack.c.l.b16 %v404
        %v549 = vunpack.c.l.b16 %v405
        %v550 = vunpack.c.l.b16 %v406
        %v551 = vunpack.c.l.b16 %v407
        %v552 = vpack.c.b16 %v521, %v520
        %v553 = vpack.c.b16 %v523, %v522
        %v554 = vpack.c.b16 %v525, %v524
        %v555 = vpack.c.b16 %v527, %v526
        %v556 = vpack.c.b16 %v529, %v528
        %v557 = vpack.c.b16 %v531, %v530
        %v558 = vpack.c.b16 %v533, %v532
        %v559 = vpack.c.b16 %v535, %v534
        %v560 = vpack.c.b16 %v537, %v536
        %v561 = vpack.c.b16 %v539, %v538
        %v562 = vpack.c.b16 %v541, %v540
        %v563 = vpack.c.b16 %v543, %v542
        %v564 = vpack.c.b16 %v545, %v544
        %v565 = vpack.c.b16 %v547, %v546
        %v566 = vpack.c.b16 %v549, %v548
        %v567 = vpack.c.b16 %v551, %v550
        %vm568 = vcmask 523264
        %v570 = vsel %vm568, %v480, 0
        %v573 = vsel %vm568, %v481, 0
        %v576 = vsel %vm568, %v482, 0
        %v579 = vsel %vm568, %v483, 0
        %v582 = vsel %vm568, %v484, 0
        %v585 = vsel %vm568, %v485, 0
        %v588 = vsel %vm568, %v486, 0
        %v591 = vsel %vm568, %v487, 0
        %v594 = vsel %vm568, %v552, 0
        %v597 = vsel %vm568, %v553, 0
        %v600 = vsel %vm568, %v554, 0
        %v603 = vsel %vm568, %v555, 0
        %v606 = vsel %vm568, %v556, 0
        %v609 = vsel %vm568, %v557, 0
        %v612 = vsel %vm568, %v558, 0
        %v615 = vsel %vm568, %v559, 0
        %v618 = vsel %vm568, %v560, 0
        %v621 = vsel %vm568, %v561, 0
        %v624 = vsel %vm568, %v562, 0
        %v627 = vsel %vm568, %v563, 0
        %v630 = vsel %vm568, %v564, 0
        %v633 = vsel %vm568, %v565, 0
        %v636 = vsel %vm568, %v566, 0
        %v639 = vsel %vm568, %v567, 0
        %641 = vmatprep.subr.bf16.mxu0 0
        %642 = vmatpush1.bf16.xpose.msra.mxu0 %v594
        %643 = vmatprep.subr.bf16.mxu0 0
        %644 = vmatpush1.bf16.xpose.msra.mxu0 %v597
        %645 = vmatprep.subr.bf16.mxu0 0
        %646 = vmatpush1.bf16.xpose.msra.mxu0 %v600
        %647 = vmatprep.subr.bf16.mxu0 0
        %648 = vmatpush1.bf16.xpose.msra.mxu0 %v603
        %649 = vmatprep.subr.bf16.mxu0 0
        %650 = vmatpush1.bf16.xpose.msra.mxu0 %v606
        %651 = vmatprep.subr.bf16.mxu0 0
        %652 = vmatpush1.bf16.xpose.msra.mxu0 %v609
        %653 = vmatprep.subr.bf16.mxu0 0
        %654 = vmatpush1.bf16.xpose.msra.mxu0 %v612
        %655 = vmatprep.subr.bf16.mxu0 0
        %656 = vmatpush1.bf16.xpose.msra.mxu0 %v615
        %657 = vmatprep.subr.bf16.mxu0 0
        %658 = vmatpush1.bf16.xpose.msra.mxu0 %v618
        %659 = vmatprep.subr.bf16.mxu0 0
        %660 = vmatpush1.bf16.xpose.msra.mxu0 %v621
        %661 = vmatprep.subr.bf16.mxu0 0
        %662 = vmatpush1.bf16.xpose.msra.mxu0 %v624
        %663 = vmatprep.subr.bf16.mxu0 0
        %664 = vmatpush1.bf16.xpose.msra.mxu0 %v627
        %665 = vmatprep.subr.bf16.mxu0 0
        %666 = vmatpush1.bf16.xpose.msra.mxu0 %v630
        %667 = vmatprep.subr.bf16.mxu0 0
        %668 = vmatpush1.bf16.xpose.msra.mxu0 %v633
        %669 = vmatprep.subr.bf16.mxu0 0
        %670 = vmatpush1.bf16.xpose.msra.mxu0 %v636
        %671 = vmatprep.subr.bf16.mxu0 0
        %672 = vmatpush1.bf16.xpose.msra.mxu0 %v639
        %673 = vmatprep.mubr.bf16.mxu0 0
        %674 = vmatmul.mubr.bf16.gmra.mrb[0].mxu0 %v570
        %v675 = vpop.f32.mrb[0].mxu0
        %v676 = vadd.f32 0.0, %v675
        %v677 = vpop.f32.mrb[0].mxu0
        %v678 = vadd.f32 0.0, %v677
        %v679 = vpop.f32.mrb[0].mxu0
        %v680 = vadd.f32 0.0, %v679
        %v681 = vpop.f32.mrb[0].mxu0
        %v682 = vadd.f32 0.0, %v681
        %683 = vmatprep.mubr.bf16.mxu0 0
        %684 = vmatmul.mubr.bf16.gmra.mrb[0].mxu0 %v573
        %v685 = vpop.f32.mrb[0].mxu0
        %v686 = vadd.f32 0.0, %v685
        %v687 = vpop.f32.mrb[0].mxu0
        %v688 = vadd.f32 0.0, %v687
        %v689 = vpop.f32.mrb[0].mxu0
        %v690 = vadd.f32 0.0, %v689
        %v691 = vpop.f32.mrb[0].mxu0
        %v692 = vadd.f32 0.0, %v691
        %693 = vmatprep.mubr.bf16.mxu0 0
        %694 = vmatmul.mubr.bf16.gmra.mrb[0].mxu0 %v576
        %v695 = vpop.f32.mrb[0].mxu0
        %v696 = vadd.f32 0.0, %v695
        %v697 = vpop.f32.mrb[0].mxu0
        %v698 = vadd.f32 0.0, %v697
        %v699 = vpop.f32.mrb[0].mxu0
        %v700 = vadd.f32 0.0, %v699
        %v701 = vpop.f32.mrb[0].mxu0
        %v702 = vadd.f32 0.0, %v701
        %703 = vmatprep.mubr.bf16.mxu0 0
        %704 = vmatmul.mubr.bf16.gmra.mrb[0].mxu0 %v579
        %v705 = vpop.f32.mrb[0].mxu0
        %v706 = vadd.f32 0.0, %v705
        %v707 = vpop.f32.mrb[0].mxu0
        %v708 = vadd.f32 0.0, %v707
        %v709 = vpop.f32.mrb[0].mxu0
        %v710 = vadd.f32 0.0, %v709
        %v711 = vpop.f32.mrb[0].mxu0
        %v712 = vadd.f32 0.0, %v711
        %713 = vmatprep.mubr.bf16.mxu0 0
        %714 = vmatmul.mubr.bf16.gmra.mrb[0].mxu0 %v582
        %v715 = vpop.f32.mrb[0].mxu0
        %v716 = vadd.f32 0.0, %v715
        %v717 = vpop.f32.mrb[0].mxu0
        %v718 = vadd.f32 0.0, %v717
        %v719 = vpop.f32.mrb[0].mxu0
        %v720 = vadd.f32 0.0, %v719
        %v721 = vpop.f32.mrb[0].mxu0
        %v722 = vadd.f32 0.0, %v721
        %723 = vmatprep.mubr.bf16.mxu0 0
        %724 = vmatmul.mubr.bf16.gmra.mrb[0].mxu0 %v585
        %v725 = vpop.f32.mrb[0].mxu0
        %v726 = vadd.f32 0.0, %v725
        %v727 = vpop.f32.mrb[0].mxu0
        %v728 = vadd.f32 0.0, %v727
        %v729 = vpop.f32.mrb[0].mxu0
        %v730 = vadd.f32 0.0, %v729
        %v731 = vpop.f32.mrb[0].mxu0
        %v732 = vadd.f32 0.0, %v731
        %733 = vmatprep.mubr.bf16.mxu0 0
        %734 = vmatmul.mubr.bf16.gmra.mrb[0].mxu0 %v588
        %v735 = vpop.f32.mrb[0].mxu0
        %v736 = vadd.f32 0.0, %v735
        %v737 = vpop.f32.mrb[0].mxu0
        %v738 = vadd.f32 0.0, %v737
        %v739 = vpop.f32.mrb[0].mxu0
        %v740 = vadd.f32 0.0, %v739
        %v741 = vpop.f32.mrb[0].mxu0
        %v742 = vadd.f32 0.0, %v741
        %743 = vmatprep.mubr.bf16.mxu0 0
        %744 = vmatmul.mubr.bf16.gmra.mrb[0].mxu0 %v591
        %v745 = vpop.f32.mrb[0].mxu0
        %v746 = vadd.f32 0.0, %v745
        %v747 = vpop.f32.mrb[0].mxu0
        %v748 = vadd.f32 0.0, %v747
        %v749 = vpop.f32.mrb[0].mxu0
        %v750 = vadd.f32 0.0, %v749
        %v751 = vpop.f32.mrb[0].mxu0
        %v752 = vadd.f32 0.0, %v751
        %753 = vdwg.mxu0
        %v754 = vmul.f32 %v676, 0.125
        %v755 = vmul.f32 %v678, 0.125
        %v756 = vmul.f32 %v680, 0.125
        %v757 = vmul.f32 %v682, 0.125
        %v758 = vmul.f32 %v686, 0.125
        %v759 = vmul.f32 %v688, 0.125
        %v760 = vmul.f32 %v690, 0.125
        %v761 = vmul.f32 %v692, 0.125
        %v762 = vmul.f32 %v696, 0.125
        %v763 = vmul.f32 %v698, 0.125
        %v764 = vmul.f32 %v700, 0.125
        %v765 = vmul.f32 %v702, 0.125
        %v766 = vmul.f32 %v706, 0.125
        %v767 = vmul.f32 %v708, 0.125
        %v768 = vmul.f32 %v710, 0.125
        %v769 = vmul.f32 %v712, 0.125
        %v770 = vmul.f32 %v716, 0.125
        %v771 = vmul.f32 %v718, 0.125
        %v772 = vmul.f32 %v720, 0.125
        %v773 = vmul.f32 %v722, 0.125
        %v774 = vmul.f32 %v726, 0.125
        %v775 = vmul.f32 %v728, 0.125
        %v776 = vmul.f32 %v730, 0.125
        %v777 = vmul.f32 %v732, 0.125
        %v778 = vmul.f32 %v736, 0.125
        %v779 = vmul.f32 %v738, 0.125
        %v780 = vmul.f32 %v740, 0.125
        %v781 = vmul.f32 %v742, 0.125
        %v782 = vmul.f32 %v746, 0.125
        %v783 = vmul.f32 %v748, 0.125
        %v784 = vmul.f32 %v750, 0.125
        %v785 = vmul.f32 %v752, 0.125
        %vm786 = vnez %v440
        %vm787 = vnez %v441
        %vm788 = vnez %v442
        %vm789 = vnez %v443
        %vm790 = vnez %v444
        %vm791 = vnez %v445
        %vm792 = vnez %v446
        %vm793 = vnez %v447
        %v794 = vsel %vm786, 16843009, 0
        %v795 = vsel %vm787, 16843009, 0
        %v796 = vsel %vm788, 16843009, 0
        %v797 = vsel %vm789, 16843009, 0
        %v798 = vsel %vm790, 16843009, 0
        %v799 = vsel %vm791, 16843009, 0
        %v800 = vsel %vm792, 16843009, 0
        %v801 = vsel %vm793, 16843009, 0
        %v802 = vunpack.c.0.s8 %v794
        %v803 = vunpack.c.0.s8 %v795
        %v804 = vunpack.c.1.s8 %v794
        %v805 = vunpack.c.1.s8 %v795
        %v806 = vunpack.c.2.s8 %v794
        %v807 = vunpack.c.2.s8 %v795
        %v808 = vunpack.c.3.s8 %v794
        %v809 = vunpack.c.3.s8 %v795
        %v810 = vunpack.c.0.s8 %v796
        %v811 = vunpack.c.0.s8 %v797
        %v812 = vunpack.c.1.s8 %v796
        %v813 = vunpack.c.1.s8 %v797
        %v814 = vunpack.c.2.s8 %v796
        %v815 = vunpack.c.2.s8 %v797
        %v816 = vunpack.c.3.s8 %v796
        %v817 = vunpack.c.3.s8 %v797
        %v818 = vunpack.c.0.s8 %v798
        %v819 = vunpack.c.0.s8 %v799
        %v820 = vunpack.c.1.s8 %v798
        %v821 = vunpack.c.1.s8 %v799
        %v822 = vunpack.c.2.s8 %v798
        %v823 = vunpack.c.2.s8 %v799
        %v824 = vunpack.c.3.s8 %v798
        %v825 = vunpack.c.3.s8 %v799
        %v826 = vunpack.c.0.s8 %v800
        %v827 = vunpack.c.0.s8 %v801
        %v828 = vunpack.c.1.s8 %v800
        %v829 = vunpack.c.1.s8 %v801
        %v830 = vunpack.c.2.s8 %v800
        %v831 = vunpack.c.2.s8 %v801
        %v832 = vunpack.c.3.s8 %v800
        %v833 = vunpack.c.3.s8 %v801
        %v834 = vpack.c.b16 %v803, %v802
        %v835 = vpack.c.b8 %v834, %v834
        %v836 = vpack.c.b16 %v805, %v804
        %v837 = vpack.c.b8 %v836, %v836
        %v838 = vpack.c.b16 %v807, %v806
        %v839 = vpack.c.b8 %v838, %v838
        %v840 = vpack.c.b16 %v809, %v808
        %v841 = vpack.c.b8 %v840, %v840
        %v842 = vpack.c.b16 %v811, %v810
        %v843 = vpack.c.b8 %v842, %v842
        %v844 = vpack.c.b16 %v813, %v812
        %v845 = vpack.c.b8 %v844, %v844
        %v846 = vpack.c.b16 %v815, %v814
        %v847 = vpack.c.b8 %v846, %v846
        %v848 = vpack.c.b16 %v817, %v816
        %v849 = vpack.c.b8 %v848, %v848
        %v850 = vpack.c.b16 %v819, %v818
        %v851 = vpack.c.b8 %v850, %v850
        %v852 = vpack.c.b16 %v821, %v820
        %v853 = vpack.c.b8 %v852, %v852
        %v854 = vpack.c.b16 %v823, %v822
        %v855 = vpack.c.b8 %v854, %v854
        %v856 = vpack.c.b16 %v825, %v824
        %v857 = vpack.c.b8 %v856, %v856
        %v858 = vpack.c.b16 %v827, %v826
        %v859 = vpack.c.b8 %v858, %v858
        %v860 = vpack.c.b16 %v829, %v828
        %v861 = vpack.c.b8 %v860, %v860
        %v862 = vpack.c.b16 %v831, %v830
        %v863 = vpack.c.b8 %v862, %v862
        %v864 = vpack.c.b16 %v833, %v832
        %v865 = vpack.c.b8 %v864, %v864
        %vm866 = vnez %v835
        %vm867 = vnez %v837
        %vm868 = vnez %v839
        %vm869 = vnez %v841
        %vm870 = vnez %v843
        %vm871 = vnez %v845
        %vm872 = vnez %v847
        %vm873 = vnez %v849
        %vm874 = vnez %v851
        %vm875 = vnez %v853
        %vm876 = vnez %v855
        %vm877 = vnez %v857
        %vm878 = vnez %v859
        %vm879 = vnez %v861
        %vm880 = vnez %v863
        %vm881 = vnez %v865
        %v882 = vsel %vm866, 16843009, 0
        %v883 = vsel %vm867, 16843009, 0
        %v884 = vsel %vm868, 16843009, 0
        %v885 = vsel %vm869, 16843009, 0
        %v886 = vsel %vm870, 16843009, 0
        %v887 = vsel %vm871, 16843009, 0
        %v888 = vsel %vm872, 16843009, 0
        %v889 = vsel %vm873, 16843009, 0
        %v890 = vsel %vm874, 16843009, 0
        %v891 = vsel %vm875, 16843009, 0
        %v892 = vsel %vm876, 16843009, 0
        %v893 = vsel %vm877, 16843009, 0
        %v894 = vsel %vm878, 16843009, 0
        %v895 = vsel %vm879, 16843009, 0
        %v896 = vsel %vm880, 16843009, 0
        %v897 = vsel %vm881, 16843009, 0
        %v898 = vunpack.c.0.s8 %v882
        %v899 = vunpack.c.1.s8 %v882
        %v900 = vunpack.c.0.s8 %v883
        %v901 = vunpack.c.1.s8 %v883
        %v902 = vunpack.c.0.s8 %v884
        %v903 = vunpack.c.1.s8 %v884
        %v904 = vunpack.c.0.s8 %v885
        %v905 = vunpack.c.1.s8 %v885
        %v906 = vunpack.c.0.s8 %v886
        %v907 = vunpack.c.1.s8 %v886
        %v908 = vunpack.c.0.s8 %v887
        %v909 = vunpack.c.1.s8 %v887
        %v910 = vunpack.c.0.s8 %v888
        %v911 = vunpack.c.1.s8 %v888
        %v912 = vunpack.c.0.s8 %v889
        %v913 = vunpack.c.1.s8 %v889
        %v914 = vunpack.c.0.s8 %v890
        %v915 = vunpack.c.1.s8 %v890
        %v916 = vunpack.c.0.s8 %v891
        %v917 = vunpack.c.1.s8 %v891
        %v918 = vunpack.c.0.s8 %v892
        %v919 = vunpack.c.1.s8 %v892
        %v920 = vunpack.c.0.s8 %v893
        %v921 = vunpack.c.1.s8 %v893
        %v922 = vunpack.c.0.s8 %v894
        %v923 = vunpack.c.1.s8 %v894
        %v924 = vunpack.c.0.s8 %v895
        %v925 = vunpack.c.1.s8 %v895
        %v926 = vunpack.c.0.s8 %v896
        %v927 = vunpack.c.1.s8 %v896
        %v928 = vunpack.c.0.s8 %v897
        %v929 = vunpack.c.1.s8 %v897
        %vm930 = vcmp.ne.s32.totalorder %v898, 0
        %vm931 = vcmp.ne.s32.totalorder %v899, 0
        %vm932 = vcmp.ne.s32.totalorder %v900, 0
        %vm933 = vcmp.ne.s32.totalorder %v901, 0
        %vm934 = vcmp.ne.s32.totalorder %v902, 0
        %vm935 = vcmp.ne.s32.totalorder %v903, 0
        %vm936 = vcmp.ne.s32.totalorder %v904, 0
        %vm937 = vcmp.ne.s32.totalorder %v905, 0
        %vm938 = vcmp.ne.s32.totalorder %v906, 0
        %vm939 = vcmp.ne.s32.totalorder %v907, 0
        %vm940 = vcmp.ne.s32.totalorder %v908, 0
        %vm941 = vcmp.ne.s32.totalorder %v909, 0
        %vm942 = vcmp.ne.s32.totalorder %v910, 0
        %vm943 = vcmp.ne.s32.totalorder %v911, 0
        %vm944 = vcmp.ne.s32.totalorder %v912, 0
        %vm945 = vcmp.ne.s32.totalorder %v913, 0
        %vm946 = vcmp.ne.s32.totalorder %v914, 0
        %vm947 = vcmp.ne.s32.totalorder %v915, 0
        %vm948 = vcmp.ne.s32.totalorder %v916, 0
        %vm949 = vcmp.ne.s32.totalorder %v917, 0
        %vm950 = vcmp.ne.s32.totalorder %v918, 0
        %vm951 = vcmp.ne.s32.totalorder %v919, 0
        %vm952 = vcmp.ne.s32.totalorder %v920, 0
        %vm953 = vcmp.ne.s32.totalorder %v921, 0
        %vm954 = vcmp.ne.s32.totalorder %v922, 0
        %vm955 = vcmp.ne.s32.totalorder %v923, 0
        %vm956 = vcmp.ne.s32.totalorder %v924, 0
        %vm957 = vcmp.ne.s32.totalorder %v925, 0
        %vm958 = vcmp.ne.s32.totalorder %v926, 0
        %vm959 = vcmp.ne.s32.totalorder %v927, 0
        %vm960 = vcmp.ne.s32.totalorder %v928, 0
        %vm961 = vcmp.ne.s32.totalorder %v929, 0
        %v962 = vsel %vm930, -1e+09, %v754
        %v963 = vsel %vm931, -1e+09, %v755
        %v964 = vsel %vm932, -1e+09, %v756
        %v965 = vsel %vm933, -1e+09, %v757
        %v966 = vsel %vm934, -1e+09, %v758
        %v967 = vsel %vm935, -1e+09, %v759
        %v968 = vsel %vm936, -1e+09, %v760
        %v969 = vsel %vm937, -1e+09, %v761
        %v970 = vsel %vm938, -1e+09, %v762
        %v971 = vsel %vm939, -1e+09, %v763
        %v972 = vsel %vm940, -1e+09, %v764
        %v973 = vsel %vm941, -1e+09, %v765
        %v974 = vsel %vm942, -1e+09, %v766
        %v975 = vsel %vm943, -1e+09, %v767
        %v976 = vsel %vm944, -1e+09, %v768
        %v977 = vsel %vm945, -1e+09, %v769
        %v978 = vsel %vm946, -1e+09, %v770
        %v979 = vsel %vm947, -1e+09, %v771
        %v980 = vsel %vm948, -1e+09, %v772
        %v981 = vsel %vm949, -1e+09, %v773
        %v982 = vsel %vm950, -1e+09, %v774
        %v983 = vsel %vm951, -1e+09, %v775
        %v984 = vsel %vm952, -1e+09, %v776
        %v985 = vsel %vm953, -1e+09, %v777
        %v986 = vsel %vm954, -1e+09, %v778
        %v987 = vsel %vm955, -1e+09, %v779
        %v988 = vsel %vm956, -1e+09, %v780
        %v989 = vsel %vm957, -1e+09, %v781
        %v990 = vsel %vm958, -1e+09, %v782
        %v991 = vsel %vm959, -1e+09, %v783
        %v992 = vsel %vm960, -1e+09, %v784
        %v993 = vsel %vm961, -1e+09, %v785
        %v994 = vmax.f32 %v962, %v963
        %995 = vmax.xlane.f32.xlu0 %v994
        %v996 = vpop.xlane.xlu0 %995
        %v997 = vmax.f32 %v964, %v965
        %998 = vmax.xlane.f32.xlu0 %v997
        %v999 = vpop.xlane.xlu0 %998
        %v1000 = vmax.f32 %v966, %v967
        %1001 = vmax.xlane.f32.xlu0 %v1000
        %v1002 = vpop.xlane.xlu0 %1001
        %v1003 = vmax.f32 %v968, %v969
        %1004 = vmax.xlane.f32.xlu0 %v1003
        %v1005 = vpop.xlane.xlu0 %1004
        %v1006 = vmax.f32 %v970, %v971
        %1007 = vmax.xlane.f32.xlu0 %v1006
        %v1008 = vpop.xlane.xlu0 %1007
        %v1009 = vmax.f32 %v972, %v973
        %1010 = vmax.xlane.f32.xlu0 %v1009
        %v1011 = vpop.xlane.xlu0 %1010
        %v1012 = vmax.f32 %v974, %v975
        %1013 = vmax.xlane.f32.xlu0 %v1012
        %v1014 = vpop.xlane.xlu0 %1013
        %v1015 = vmax.f32 %v976, %v977
        %1016 = vmax.xlane.f32.xlu0 %v1015
        %v1017 = vpop.xlane.xlu0 %1016
        %v1018 = vmax.f32 %v978, %v979
        %1019 = vmax.xlane.f32.xlu0 %v1018
        %v1020 = vpop.xlane.xlu0 %1019
        %v1021 = vmax.f32 %v980, %v981
        %1022 = vmax.xlane.f32.xlu0 %v1021
        %v1023 = vpop.xlane.xlu0 %1022
        %v1024 = vmax.f32 %v982, %v983
        %1025 = vmax.xlane.f32.xlu0 %v1024
        %v1026 = vpop.xlane.xlu0 %1025
        %v1027 = vmax.f32 %v984, %v985
        %1028 = vmax.xlane.f32.xlu0 %v1027
        %v1029 = vpop.xlane.xlu0 %1028
        %v1030 = vmax.f32 %v986, %v987
        %1031 = vmax.xlane.f32.xlu0 %v1030
        %v1032 = vpop.xlane.xlu0 %1031
        %v1033 = vmax.f32 %v988, %v989
        %1034 = vmax.xlane.f32.xlu0 %v1033
        %v1035 = vpop.xlane.xlu0 %1034
        %v1036 = vmax.f32 %v990, %v991
        %1037 = vmax.xlane.f32.xlu0 %v1036
        %v1038 = vpop.xlane.xlu0 %1037
        %v1039 = vmax.f32 %v992, %v993
        %1040 = vmax.xlane.f32.xlu0 %v1039
        %v1041 = vpop.xlane.xlu0 %1040
        %v1042 = vsub.f32 %v962, %v996
        %v1043 = vsub.f32 %v963, %v996
        %v1044 = vsub.f32 %v964, %v999
        %v1045 = vsub.f32 %v965, %v999
        %v1046 = vsub.f32 %v966, %v1002
        %v1047 = vsub.f32 %v967, %v1002
        %v1048 = vsub.f32 %v968, %v1005
        %v1049 = vsub.f32 %v969, %v1005
        %v1050 = vsub.f32 %v970, %v1008
        %v1051 = vsub.f32 %v971, %v1008
        %v1052 = vsub.f32 %v972, %v1011
        %v1053 = vsub.f32 %v973, %v1011
        %v1054 = vsub.f32 %v974, %v1014
        %v1055 = vsub.f32 %v975, %v1014
        %v1056 = vsub.f32 %v976, %v1017
        %v1057 = vsub.f32 %v977, %v1017
        %v1058 = vsub.f32 %v978, %v1020
        %v1059 = vsub.f32 %v979, %v1020
        %v1060 = vsub.f32 %v980, %v1023
        %v1061 = vsub.f32 %v981, %v1023
        %v1062 = vsub.f32 %v982, %v1026
        %v1063 = vsub.f32 %v983, %v1026
        %v1064 = vsub.f32 %v984, %v1029
        %v1065 = vsub.f32 %v985, %v1029
        %v1066 = vsub.f32 %v986, %v1032
        %v1067 = vsub.f32 %v987, %v1032
        %v1068 = vsub.f32 %v988, %v1035
        %v1069 = vsub.f32 %v989, %v1035
        %v1070 = vsub.f32 %v990, %v1038
        %v1071 = vsub.f32 %v991, %v1038
        %v1072 = vsub.f32 %v992, %v1041
        %v1073 = vsub.f32 %v993, %v1041
        %v1074 = vmul.f32 %v1042, 1.442695
        %v1075 = vpow.pop %v1074
        %v1076 = vmul.f32 %v1043, 1.442695
        %v1077 = vpow.pop %v1076
        %v1078 = vmul.f32 %v1044, 1.442695
        %v1079 = vpow.pop %v1078
        %v1080 = vmul.f32 %v1045, 1.442695
        %v1081 = vpow.pop %v1080
        %v1082 = vmul.f32 %v1046, 1.442695
        %v1083 = vpow.pop %v1082
        %v1084 = vmul.f32 %v1047, 1.442695
        %v1085 = vpow.pop %v1084
        %v1086 = vmul.f32 %v1048, 1.442695
        %v1087 = vpow.pop %v1086
        %v1088 = vmul.f32 %v1049, 1.442695
        %v1089 = vpow.pop %v1088
        %v1090 = vmul.f32 %v1050, 1.442695
        %v1091 = vpow.pop %v1090
        %v1092 = vmul.f32 %v1051, 1.442695
        %v1093 = vpow.pop %v1092
        %v1094 = vmul.f32 %v1052, 1.442695
        %v1095 = vpow.pop %v1094
        %v1096 = vmul.f32 %v1053, 1.442695
        %v1097 = vpow.pop %v1096
        %v1098 = vmul.f32 %v1054, 1.442695
        %v1099 = vpow.pop %v1098
        %v1100 = vmul.f32 %v1055, 1.442695
        %v1101 = vpow.pop %v1100
        %v1102 = vmul.f32 %v1056, 1.442695
        %v1103 = vpow.pop %v1102
        %v1104 = vmul.f32 %v1057, 1.442695
        %v1105 = vpow.pop %v1104
        %v1106 = vmul.f32 %v1058, 1.442695
        %v1107 = vpow.pop %v1106
        %v1108 = vmul.f32 %v1059, 1.442695
        %v1109 = vpow.pop %v1108
        %v1110 = vmul.f32 %v1060, 1.442695
        %v1111 = vpow.pop %v1110
        %v1112 = vmul.f32 %v1061, 1.442695
        %v1113 = vpow.pop %v1112
        %v1114 = vmul.f32 %v1062, 1.442695
        %v1115 = vpow.pop %v1114
        %v1116 = vmul.f32 %v1063, 1.442695
        %v1117 = vpow.pop %v1116
        %v1118 = vmul.f32 %v1064, 1.442695
        %v1119 = vpow.pop %v1118
        %v1120 = vmul.f32 %v1065, 1.442695
        %v1121 = vpow.pop %v1120
        %v1122 = vmul.f32 %v1066, 1.442695
        %v1123 = vpow.pop %v1122
        %v1124 = vmul.f32 %v1067, 1.442695
        %v1125 = vpow.pop %v1124
        %v1126 = vmul.f32 %v1068, 1.442695
        %v1127 = vpow.pop %v1126
        %v1128 = vmul.f32 %v1069, 1.442695
        %v1129 = vpow.pop %v1128
        %v1130 = vmul.f32 %v1070, 1.442695
        %v1131 = vpow.pop %v1130
        %v1132 = vmul.f32 %v1071, 1.442695
        %v1133 = vpow.pop %v1132
        %v1134 = vmul.f32 %v1072, 1.442695
        %v1135 = vpow.pop %v1134
        %v1136 = vmul.f32 %v1073, 1.442695
        %v1137 = vpow.pop %v1136
        %v1138 = vadd.f32 %v1075, %v1077
        %1139 = vadd.xlane.f32.xlu0 %v1138
        %v1140 = vpop.xlane.xlu0 %1139
        %v1141 = vadd.f32 %v1079, %v1081
        %1142 = vadd.xlane.f32.xlu0 %v1141
        %v1143 = vpop.xlane.xlu0 %1142
        %v1144 = vadd.f32 %v1083, %v1085
        %1145 = vadd.xlane.f32.xlu0 %v1144
        %v1146 = vpop.xlane.xlu0 %1145
        %v1147 = vadd.f32 %v1087, %v1089
        %1148 = vadd.xlane.f32.xlu0 %v1147
        %v1149 = vpop.xlane.xlu0 %1148
        %v1150 = vadd.f32 %v1091, %v1093
        %1151 = vadd.xlane.f32.xlu0 %v1150
        %v1152 = vpop.xlane.xlu0 %1151
        %v1153 = vadd.f32 %v1095, %v1097
        %1154 = vadd.xlane.f32.xlu0 %v1153
        %v1155 = vpop.xlane.xlu0 %1154
        %v1156 = vadd.f32 %v1099, %v1101
        %1157 = vadd.xlane.f32.xlu0 %v1156
        %v1158 = vpop.xlane.xlu0 %1157
        %v1159 = vadd.f32 %v1103, %v1105
        %1160 = vadd.xlane.f32.xlu0 %v1159
        %v1161 = vpop.xlane.xlu0 %1160
        %v1162 = vadd.f32 %v1107, %v1109
        %1163 = vadd.xlane.f32.xlu0 %v1162
        %v1164 = vpop.xlane.xlu0 %1163
        %v1165 = vadd.f32 %v1111, %v1113
        %1166 = vadd.xlane.f32.xlu0 %v1165
        %v1167 = vpop.xlane.xlu0 %1166
        %v1168 = vadd.f32 %v1115, %v1117
        %1169 = vadd.xlane.f32.xlu0 %v1168
        %v1170 = vpop.xlane.xlu0 %1169
        %v1171 = vadd.f32 %v1119, %v1121
        %1172 = vadd.xlane.f32.xlu0 %v1171
        %v1173 = vpop.xlane.xlu0 %1172
        %v1174 = vadd.f32 %v1123, %v1125
        %1175 = vadd.xlane.f32.xlu0 %v1174
        %v1176 = vpop.xlane.xlu0 %1175
        %v1177 = vadd.f32 %v1127, %v1129
        %1178 = vadd.xlane.f32.xlu0 %v1177
        %v1179 = vpop.xlane.xlu0 %1178
        %v1180 = vadd.f32 %v1131, %v1133
        %1181 = vadd.xlane.f32.xlu0 %v1180
        %v1182 = vpop.xlane.xlu0 %1181
        %v1183 = vadd.f32 %v1135, %v1137
        %1184 = vadd.xlane.f32.xlu0 %v1183
        %v1185 = vpop.xlane.xlu0 %1184
        %v1186 = vrcp.pop %v1140
        %v1187 = vrcp.pop %v1143
        %v1188 = vrcp.pop %v1146
        %v1189 = vrcp.pop %v1149
        %v1190 = vrcp.pop %v1152
        %v1191 = vrcp.pop %v1155
        %v1192 = vrcp.pop %v1158
        %v1193 = vrcp.pop %v1161
        %v1194 = vrcp.pop %v1164
        %v1195 = vrcp.pop %v1167
        %v1196 = vrcp.pop %v1170
        %v1197 = vrcp.pop %v1173
        %v1198 = vrcp.pop %v1176
        %v1199 = vrcp.pop %v1179
        %v1200 = vrcp.pop %v1182
        %v1201 = vrcp.pop %v1185
        %v1202 = vmul.f32 %v1075, %v1186
        %v1203 = vmul.f32 %v1077, %v1186
        %v1204 = vmul.f32 %v1079, %v1187
        %v1205 = vmul.f32 %v1081, %v1187
        %v1206 = vmul.f32 %v1083, %v1188
        %v1207 = vmul.f32 %v1085, %v1188
        %v1208 = vmul.f32 %v1087, %v1189
        %v1209 = vmul.f32 %v1089, %v1189
        %v1210 = vmul.f32 %v1091, %v1190
        %v1211 = vmul.f32 %v1093, %v1190
        %v1212 = vmul.f32 %v1095, %v1191
        %v1213 = vmul.f32 %v1097, %v1191
        %v1214 = vmul.f32 %v1099, %v1192
        %v1215 = vmul.f32 %v1101, %v1192
        %v1216 = vmul.f32 %v1103, %v1193
        %v1217 = vmul.f32 %v1105, %v1193
        %v1218 = vmul.f32 %v1107, %v1194
        %v1219 = vmul.f32 %v1109, %v1194
        %v1220 = vmul.f32 %v1111, %v1195
        %v1221 = vmul.f32 %v1113, %v1195
        %v1222 = vmul.f32 %v1115, %v1196
        %v1223 = vmul.f32 %v1117, %v1196
        %v1224 = vmul.f32 %v1119, %v1197
        %v1225 = vmul.f32 %v1121, %v1197
        %v1226 = vmul.f32 %v1123, %v1198
        %v1227 = vmul.f32 %v1125, %v1198
        %v1228 = vmul.f32 %v1127, %v1199
        %v1229 = vmul.f32 %v1129, %v1199
        %v1230 = vmul.f32 %v1131, %v1200
        %v1231 = vmul.f32 %v1133, %v1200
        %v1232 = vmul.f32 %v1135, %v1201
        %v1233 = vmul.f32 %v1137, %v1201
        %1234 = vst [vmem:[%s314] sm:$0xff] %v1202
        %1235 = vst [vmem:[%s314 + $0x8] sm:$0xff] %v1203
        %1236 = vst [vmem:[%s314 + $0x10] sm:$0xff] %v1204
        %1237 = vst [vmem:[%s314 + $0x18] sm:$0xff] %v1205
        %1238 = vst [vmem:[%s314 + $0x20] sm:$0xff] %v1206
        %1239 = vst [vmem:[%s314 + $0x28] sm:$0xff] %v1207
        %1240 = vst [vmem:[%s314 + $0x30] sm:$0xff] %v1208
        %1241 = vst [vmem:[%s314 + $0x38] sm:$0xff] %v1209
        %1242 = vst [vmem:[%s314 + $0x40] sm:$0xff] %v1210
        %1243 = vst [vmem:[%s314 + $0x48] sm:$0xff] %v1211
        %1244 = vst [vmem:[%s314 + $0x50] sm:$0xff] %v1212
        %1245 = vst [vmem:[%s314 + $0x58] sm:$0xff] %v1213
        %1246 = vst [vmem:[%s314 + $0x60] sm:$0xff] %v1214
        %1247 = vst [vmem:[%s314 + $0x68] sm:$0xff] %v1215
        %1248 = vst [vmem:[%s314 + $0x70] sm:$0xff] %v1216
        %1249 = vst [vmem:[%s314 + $0x78] sm:$0xff] %v1217
        %1250 = vst [vmem:[%s314 + $0x80] sm:$0xff] %v1218
        %1251 = vst [vmem:[%s314 + $0x88] sm:$0xff] %v1219
        %1252 = vst [vmem:[%s314 + $0x90] sm:$0xff] %v1220
        %1253 = vst [vmem:[%s314 + $0x98] sm:$0xff] %v1221
        %1254 = vst [vmem:[%s314 + $0xa0] sm:$0xff] %v1222
        %1255 = vst [vmem:[%s314 + $0xa8] sm:$0xff] %v1223
        %1256 = vst [vmem:[%s314 + $0xb0] sm:$0xff] %v1224
        %1257 = vst [vmem:[%s314 + $0xb8] sm:$0xff] %v1225
        %1258 = vst [vmem:[%s314 + $0xc0] sm:$0xff] %v1226
        %1259 = vst [vmem:[%s314 + $0xc8] sm:$0xff] %v1227
        %1260 = vst [vmem:[%s314 + $0xd0] sm:$0xff] %v1228
        %1261 = vst [vmem:[%s314 + $0xd8] sm:$0xff] %v1229
        %1262 = vst [vmem:[%s314 + $0xe0] sm:$0xff] %v1230
        %1263 = vst [vmem:[%s314 + $0xe8] sm:$0xff] %v1231
        %1264 = vst [vmem:[%s314 + $0xf0] sm:$0xff] %v1232
        %1265 = vst [vmem:[%s314 + $0xf8] sm:$0xff] %v1233
        %v1266 = vpack.c.bf16 %v1204, %v1202
        %v1267 = vpack.c.bf16 %v1205, %v1203
        %v1268 = vpack.c.bf16 %v1208, %v1206
        %v1269 = vpack.c.bf16 %v1209, %v1207
        %v1270 = vpack.c.bf16 %v1212, %v1210
        %v1271 = vpack.c.bf16 %v1213, %v1211
        %v1272 = vpack.c.bf16 %v1216, %v1214
        %v1273 = vpack.c.bf16 %v1217, %v1215
        %v1274 = vpack.c.bf16 %v1220, %v1218
        %v1275 = vpack.c.bf16 %v1221, %v1219
        %v1276 = vpack.c.bf16 %v1224, %v1222
        %v1277 = vpack.c.bf16 %v1225, %v1223
        %v1278 = vpack.c.bf16 %v1228, %v1226
        %v1279 = vpack.c.bf16 %v1229, %v1227
        %v1280 = vpack.c.bf16 %v1232, %v1230
        %v1281 = vpack.c.bf16 %v1233, %v1231
        %v1314 = vunpack.c.l.b16 %v408
        %v1315 = vunpack.c.l.b16 %v409
        %v1316 = vunpack.c.l.b16 %v410
        %v1317 = vunpack.c.l.b16 %v411
        %v1318 = vunpack.c.l.b16 %v412
        %v1319 = vunpack.c.l.b16 %v413
        %v1320 = vunpack.c.l.b16 %v414
        %v1321 = vunpack.c.l.b16 %v415
        %v1322 = vunpack.c.l.b16 %v416
        %v1323 = vunpack.c.l.b16 %v417
        %v1324 = vunpack.c.l.b16 %v418
        %v1325 = vunpack.c.l.b16 %v419
        %v1326 = vunpack.c.l.b16 %v420
        %v1327 = vunpack.c.l.b16 %v421
        %v1328 = vunpack.c.l.b16 %v422
        %v1329 = vunpack.c.l.b16 %v423
        %v1330 = vunpack.c.l.b16 %v424
        %v1331 = vunpack.c.l.b16 %v425
        %v1332 = vunpack.c.l.b16 %v426
        %v1333 = vunpack.c.l.b16 %v427
        %v1334 = vunpack.c.l.b16 %v428
        %v1335 = vunpack.c.l.b16 %v429
        %v1336 = vunpack.c.l.b16 %v430
        %v1337 = vunpack.c.l.b16 %v431
        %v1338 = vunpack.c.l.b16 %v432
        %v1339 = vunpack.c.l.b16 %v433
        %v1340 = vunpack.c.l.b16 %v434
        %v1341 = vunpack.c.l.b16 %v435
        %v1342 = vunpack.c.l.b16 %v436
        %v1343 = vunpack.c.l.b16 %v437
        %v1344 = vunpack.c.l.b16 %v438
        %v1345 = vunpack.c.l.b16 %v439
        %v1346 = vpack.c.b16 %v1315, %v1314
        %v1347 = vpack.c.b16 %v1317, %v1316
        %v1348 = vpack.c.b16 %v1319, %v1318
        %v1349 = vpack.c.b16 %v1321, %v1320
        %v1350 = vpack.c.b16 %v1323, %v1322
        %v1351 = vpack.c.b16 %v1325, %v1324
        %v1352 = vpack.c.b16 %v1327, %v1326
        %v1353 = vpack.c.b16 %v1329, %v1328
        %v1354 = vpack.c.b16 %v1331, %v1330
        %v1355 = vpack.c.b16 %v1333, %v1332
        %v1356 = vpack.c.b16 %v1335, %v1334
        %v1357 = vpack.c.b16 %v1337, %v1336
        %v1358 = vpack.c.b16 %v1339, %v1338
        %v1359 = vpack.c.b16 %v1341, %v1340
        %v1360 = vpack.c.b16 %v1343, %v1342
        %v1361 = vpack.c.b16 %v1345, %v1344
        %1378 = vmatprep.subr.bf16.mxu0 0
        %1379 = vmatpush1.bf16.msra.mxu0 %v1346
        %1380 = vmatprep.subr.bf16.mxu0 0
        %1381 = vmatpush1.bf16.msra.mxu0 %v1347
        %1382 = vmatprep.subr.bf16.mxu0 0
        %1383 = vmatpush1.bf16.msra.mxu0 %v1348
        %1384 = vmatprep.subr.bf16.mxu0 0
        %1385 = vmatpush1.bf16.msra.mxu0 %v1349
        %1386 = vmatprep.subr.bf16.mxu0 0
        %1387 = vmatpush1.bf16.msra.mxu0 %v1350
        %1388 = vmatprep.subr.bf16.mxu0 0
        %1389 = vmatpush1.bf16.msra.mxu0 %v1351
        %1390 = vmatprep.subr.bf16.mxu0 0
        %1391 = vmatpush1.bf16.msra.mxu0 %v1352
        %1392 = vmatprep.subr.bf16.mxu0 0
        %1393 = vmatpush1.bf16.msra.mxu0 %v1353
        %1394 = vmatprep.subr.bf16.mxu0 0
        %1395 = vmatpush1.bf16.msra.mxu0 %v1354
        %1396 = vmatprep.subr.bf16.mxu0 0
        %1397 = vmatpush1.bf16.msra.mxu0 %v1355
        %1398 = vmatprep.subr.bf16.mxu0 0
        %1399 = vmatpush1.bf16.msra.mxu0 %v1356
        %1400 = vmatprep.subr.bf16.mxu0 0
        %1401 = vmatpush1.bf16.msra.mxu0 %v1357
        %1402 = vmatprep.subr.bf16.mxu0 0
        %1403 = vmatpush1.bf16.msra.mxu0 %v1358
        %1404 = vmatprep.subr.bf16.mxu0 0
        %1405 = vmatpush1.bf16.msra.mxu0 %v1359
        %1406 = vmatprep.subr.bf16.mxu0 0
        %1407 = vmatpush1.bf16.msra.mxu0 %v1360
        %1408 = vmatprep.subr.bf16.mxu0 0
        %1409 = vmatpush1.bf16.msra.mxu0 %v1361
        %1410 = vmatprep.mubr.bf16.mxu0 %v1267
        %1411 = vmatmul.mubr.bf16.gmra.mrb[0].mxu0 %v1266
        %v1412 = vpop.f32.mrb[0].mxu0
        %v1413 = vadd.f32 0.0, %v1412
        %v1414 = vpop.f32.mrb[0].mxu0
        %v1415 = vpop.f32.mrb[0].mxu0
        %v1416 = vadd.f32 0.0, %v1415
        %v1417 = vpop.f32.mrb[0].mxu0
        %1418 = vmatprep.mubr.bf16.mxu0 %v1269
        %1419 = vmatmul.mubr.bf16.gmra.mrb[0].mxu0 %v1268
        %v1420 = vpop.f32.mrb[0].mxu0
        %v1421 = vadd.f32 0.0, %v1420
        %v1422 = vpop.f32.mrb[0].mxu0
        %v1423 = vpop.f32.mrb[0].mxu0
        %v1424 = vadd.f32 0.0, %v1423
        %v1425 = vpop.f32.mrb[0].mxu0
        %1426 = vmatprep.mubr.bf16.mxu0 %v1271
        %1427 = vmatmul.mubr.bf16.gmra.mrb[0].mxu0 %v1270
        %v1428 = vpop.f32.mrb[0].mxu0
        %v1429 = vadd.f32 0.0, %v1428
        %v1430 = vpop.f32.mrb[0].mxu0
        %v1431 = vpop.f32.mrb[0].mxu0
        %v1432 = vadd.f32 0.0, %v1431
        %v1433 = vpop.f32.mrb[0].mxu0
        %1434 = vmatprep.mubr.bf16.mxu0 %v1273
        %1435 = vmatmul.mubr.bf16.gmra.mrb[0].mxu0 %v1272
        %v1436 = vpop.f32.mrb[0].mxu0
        %v1437 = vadd.f32 0.0, %v1436
        %v1438 = vpop.f32.mrb[0].mxu0
        %v1439 = vpop.f32.mrb[0].mxu0
        %v1440 = vadd.f32 0.0, %v1439
        %v1441 = vpop.f32.mrb[0].mxu0
        %1442 = vmatprep.mubr.bf16.mxu0 %v1275
        %1443 = vmatmul.mubr.bf16.gmra.mrb[0].mxu0 %v1274
        %v1444 = vpop.f32.mrb[0].mxu0
        %v1445 = vadd.f32 0.0, %v1444
        %v1446 = vpop.f32.mrb[0].mxu0
        %v1447 = vpop.f32.mrb[0].mxu0
        %v1448 = vadd.f32 0.0, %v1447
        %v1449 = vpop.f32.mrb[0].mxu0
        %1450 = vmatprep.mubr.bf16.mxu0 %v1277
        %1451 = vmatmul.mubr.bf16.gmra.mrb[0].mxu0 %v1276
        %v1452 = vpop.f32.mrb[0].mxu0
        %v1453 = vadd.f32 0.0, %v1452
        %v1454 = vpop.f32.mrb[0].mxu0
        %v1455 = vpop.f32.mrb[0].mxu0
        %v1456 = vadd.f32 0.0, %v1455
        %v1457 = vpop.f32.mrb[0].mxu0
        %1458 = vmatprep.mubr.bf16.mxu0 %v1279
        %1459 = vmatmul.mubr.bf16.gmra.mrb[0].mxu0 %v1278
        %v1460 = vpop.f32.mrb[0].mxu0
        %v1461 = vadd.f32 0.0, %v1460
        %v1462 = vpop.f32.mrb[0].mxu0
        %v1463 = vpop.f32.mrb[0].mxu0
        %v1464 = vadd.f32 0.0, %v1463
        %v1465 = vpop.f32.mrb[0].mxu0
        %1466 = vmatprep.mubr.bf16.mxu0 %v1281
        %1467 = vmatmul.mubr.bf16.gmra.mrb[0].mxu0 %v1280
        %v1468 = vpop.f32.mrb[0].mxu0
        %v1469 = vadd.f32 0.0, %v1468
        %v1470 = vpop.f32.mrb[0].mxu0
        %v1471 = vpop.f32.mrb[0].mxu0
        %v1472 = vadd.f32 0.0, %v1471
        %v1473 = vpop.f32.mrb[0].mxu0
        %1474 = vdwg.mxu0
        %1475 = vst.msk [vmem:[%s354] sm:$0xff] %vm568, %v1413
        %1476 = vst.msk [vmem:[%s354 + $0x8] sm:$0xff] %vm568, %v1416
        %1477 = vst.msk [vmem:[%s354 + $0x10] sm:$0xff] %vm568, %v1421
        %1478 = vst.msk [vmem:[%s354 + $0x18] sm:$0xff] %vm568, %v1424
        %1479 = vst.msk [vmem:[%s354 + $0x20] sm:$0xff] %vm568, %v1429
        %1480 = vst.msk [vmem:[%s354 + $0x28] sm:$0xff] %vm568, %v1432
        %1481 = vst.msk [vmem:[%s354 + $0x30] sm:$0xff] %vm568, %v1437
        %1482 = vst.msk [vmem:[%s354 + $0x38] sm:$0xff] %vm568, %v1440
        %1483 = vst.msk [vmem:[%s354 + $0x40] sm:$0xff] %vm568, %v1445
        %1484 = vst.msk [vmem:[%s354 + $0x48] sm:$0xff] %vm568, %v1448
        %1485 = vst.msk [vmem:[%s354 + $0x50] sm:$0xff] %vm568, %v1453
        %1486 = vst.msk [vmem:[%s354 + $0x58] sm:$0xff] %vm568, %v1456
        %1487 = vst.msk [vmem:[%s354 + $0x60] sm:$0xff] %vm568, %v1461
        %1488 = vst.msk [vmem:[%s354 + $0x68] sm:$0xff] %vm568, %v1464
        %1489 = vst.msk [vmem:[%s354 + $0x70] sm:$0xff] %vm568, %v1469
        %1490 = vst.msk [vmem:[%s354 + $0x78] sm:$0xff] %vm568, %v1472
        %s1491 = smul.u32 16, %s25
        %p1492 = scmp.lt.s32.totalorder %s24, 3
        %s1493 = scalar_select %p1492, %s24, 3
        %p1494 = scmp.lt.s32.totalorder %s1491, 31
        %s1495 = scalar_select %p1494, %s1491, 31
        %s1496 = smul.addr %s1493, 32
        %s1497 = sadd.s32 %s1495, %s1496
        %s1498 = smul.addr %s1497, 8
        %s1499 = scalar_lea.vmem %s4, %s1498
        %s1500 = sand.u32 %s178, 1
        %s1501 = scalar_lea.sflag [#allocation3], %s1500
        %s1502 = sand.u32 %s178, 1
        %s1503 = smul.addr %s1502, 256
        %s1504 = scalar_lea.vmem [#allocation2], %s1503
        // Predicated region
        $region37: #{tpu_custom_call.1} parent=35 // pred_check
          %p1505 = pneg %p160
        $region38: #{tpu_custom_call.1} parent=35 // pred_check_branch
          %1507 = sbr.rel (%p1505) target = $region40
        $region39: #{tpu_custom_call.1} parent=35 // pred_region
          %s1508 = smul.u32 16, %s25
        $region40: #{tpu_custom_call.1} parent=35 // pred_fallthru
          _
        // Predicated region
        $region41: #{tpu_custom_call.1} parent=35 // pred_check
          %p1509 = pneg %p188
        $region42: #{tpu_custom_call.1} parent=35 // pred_check_branch
          %1511 = sbr.rel (%p1509) target = $region44
        $region43: #{tpu_custom_call.1} parent=35 // pred_region
          %s1512 = smul.u32 16, %s25
          %s1514 = ssub.s32 4096, 4096
          %1515 = vsyncadd %s1501, %s1514
          %s1516 = smul.addr %s1512, 2
          %s1517 = smul.addr %s24, 64
          %s1518 = sadd.s32 %s1516, %s1517
          %s1519 = smul.addr %s1518, 128
          %s1520 = scalar_lea.hbm %s5, %s1519
          %s1521 = sshll.u32 %s1504, 4
          %s1522 = int_to_ptr.vmem [resolvable:$true] %s1521
          %1527 = dma.vmem_to_hbm [thread:$0]  %s1522, 4096, %s1520, %s1501, 256, 256, 16
        $region44: #{tpu_custom_call.1} parent=35 // pred_fallthru
          _
      $region36: #{tpu_custom_call.1} parent=5 // pred_fallthru
        _
      %p1528 = scmp.le.s32.totalorder 2, %s15
      // Predicated region
      $region45: #{tpu_custom_call.1} parent=5 // pred_check
        %p1529 = pneg %p1528
      $region46: #{tpu_custom_call.1} parent=5 // pred_check_branch
        %1531 = sbr.rel (%p1529) target = $region48
      $region47: #{tpu_custom_call.1} parent=5 // pred_region
        %s1532 = ssub.s32 %s15, 2
        // Predicated region
        $region49: #{tpu_custom_call.1} parent=47 // pred_check
          %p1533 = pneg %p166
        $region50: #{tpu_custom_call.1} parent=47 // pred_check_branch
          %1535 = sbr.rel (%p1533) target = $region52
        $region51: #{tpu_custom_call.1} parent=47 // pred_region
          %s1536 = smul.u32 16, %s27
          %p1537 = scmp.lt.s32.totalorder %s26, 3
          %s1538 = scalar_select %p1537, %s26, 3
          %p1539 = scmp.lt.s32.totalorder %s1536, 31
          %s1540 = scalar_select %p1539, %s1536, 31
          %s1541 = smul.addr %s1538, 32
          %s1542 = sadd.s32 %s1540, %s1541
          %s1543 = smul.addr %s1542, 8
          %s1544 = scalar_lea.vmem %s4, %s1543
        $region52: #{tpu_custom_call.1} parent=47 // pred_fallthru
          _
        // Predicated region
        $region53: #{tpu_custom_call.1} parent=47 // pred_check
          %p1545 = pneg %p194
        $region54: #{tpu_custom_call.1} parent=47 // pred_check_branch
          %1547 = sbr.rel (%p1545) target = $region56
        $region55: #{tpu_custom_call.1} parent=47 // pred_region
          %s1548 = sand.u32 %s179, 1
          %s1549 = scalar_lea.sflag [#allocation3], %s1548
          %s1550 = sand.u32 %s179, 1
          %s1551 = smul.addr %s1550, 256
          %s1552 = scalar_lea.vmem [#allocation2], %s1551
          %1553 = dma.done %s1549, 4096
        $region56: #{tpu_custom_call.1} parent=47 // pred_fallthru
          _
      $region48: #{tpu_custom_call.1} parent=5 // pred_fallthru
        _
    $region6: #{tpu_custom_call.1} parent=1 // loop_footer
      %s19 = sadd.s32 1, %s15
    $region7: #{tpu_custom_call.1} parent=1 // loop_footer_branch
      %14 = sbr.rel target = $region3
    $region8: #{tpu_custom_call.1} parent=1 // loop_exit
      _
    %1554 = vsyncpa [#allocation3], 1
    %s1555 = scalar_lea.sflag [#allocation3], 1
    %1556 = vsyncpa %s1555, 1

</llo_original>
